<compile_context>
chip_gen: v5e
topology: v5e:2x2
jax: 0.10.0
libtpu: 0.0.40
codegen_flags: <defaults>
</compile_context>

<pallas_src>
import functools

import numpy as np
import jax
import jax.numpy as jnp
from jax.experimental import pallas as pl
from jax.experimental.pallas import tpu as pltpu

BN_EPS = 1e-5


# ------------------------------- Pallas kernel ------------------------------

def _make_kernel(c_out, with_skip):
    """Kernel for one (batch element, spatial output tile) grid step."""

    def kernel(x_ref, w1_ref, b1_ref, s2_ref, t2_ref, kt_ref, w3_ref, b3_ref,
               *rest):
        if with_skip:
            skip_ref, o_ref, z_ref = rest
        else:
            o_ref, z_ref = rest

        s = pl.program_id(1)

        # conv1 + BN1 + ReLU1 + BN2 depend only on the batch index: compute once
        # per batch element (first spatial tile) and carry in VMEM scratch.
        @pl.when(s == 0)
        def _():
            x = x_ref[0]                                                  # (Cin, HW) bf16
            z = jnp.dot(w1_ref[...], x, preferred_element_type=jnp.float32)
            z = jnp.maximum(z + b1_ref[...], 0.0)                         # conv1+BN1+ReLU1
            z = z * s2_ref[...] + t2_ref[...]                             # BN2 (commutes with upsample)
            z_ref[...] = z.astype(z_ref.dtype)                            # bf16 carry

        # Bilinear x2 upsample for this column tile (lane-dense), then ReLU2.
        u = jnp.dot(z_ref[...], kt_ref[...], preferred_element_type=jnp.float32)
        u = jnp.maximum(u, 0.0)                                           # (Cmid, TILE_N)

        # conv3 + BN3 + ReLU3 (weights on the left -> lane-dense output).
        o = jnp.dot(w3_ref[...], u.astype(w3_ref.dtype),
                    preferred_element_type=jnp.float32)
        o = jnp.maximum(o + b3_ref[...], 0.0)                             # (Cout, TILE_N)

        o_ref[0, :c_out, :] = o.astype(o_ref.dtype)
        if with_skip:
            # hook.stored copied straight into its final place (fused concat).
            o_ref[0, c_out:, :] = skip_ref[0].astype(o_ref.dtype)

    return kernel


def _pick_tile_n(hw4):
    # Prefer 512 output lanes per tile (keeps all v5e MXUs fed, keeps S >= 2 at
    # typical sizes for pipelining); fall back to smaller 128-multiples, else
    # the whole row.
    for t in (512, 1024, 256, 128):
        if hw4 % t == 0:
            return t
    return hw4


def _vmem_limit_bytes(c_in, c_mid, c_out, c_skip, hw, tile_n, single_buffer):
    bf, f4 = 2, 4
    wbuf = 1 if single_buffer else 2
    total = 0
    total += 2 * c_in * hw * bf                       # x block (double buffered)
    total += wbuf * c_mid * max(c_in, 128) * bf       # folded conv1 weight
    total += wbuf * 3 * max(c_mid, 8) * 128 * f4      # conv1 bias, BN2 scale/shift
    total += 2 * hw * tile_n * bf                     # upsample operand column tile
    total += wbuf * max(c_out, 8) * max(c_mid, 128) * bf   # folded conv3 weight
    total += wbuf * max(c_out, 8) * 128 * f4          # conv3 bias
    total += 2 * c_skip * tile_n * f4                 # skip tile
    total += 2 * (c_out + c_skip) * tile_n * f4       # output tile
    total += c_mid * hw * bf                          # z carry scratch
    total = int(total * 1.5) + (1 << 20)              # headroom for padding / internals
    return min(max(total, 32 << 20), 64 << 20)        # >= default, <= v7x physical


def _decoder_pallas(x3, w1f, b1f, s2c, t2c, kt, w3f, b3f, skip3, tile_n,
                    single_buffer):
    N, Cin, HW = x3.shape
    Cmid = w1f.shape[0]
    Cout = w3f.shape[0]
    HW4 = kt.shape[1]
    S = HW4 // tile_n

    # Grid-invariant operands: single-buffer them (their index_map is constant,
    # so they are never re-DMA'd; one buffer halves their VMEM footprint).
    inv = dict(pipeline_mode=pl.Buffered(1)) if single_buffer else {}

    x_map = lambda n, s: (n, 0, 0)      # per-batch, invariant along spatial tiles
    const2 = lambda n, s: (0, 0)        # grid-invariant weights
    kt_map = lambda n, s: (0, s)        # upsample operand: column tile s
    out_map = lambda n, s: (n, 0, s)    # output / skip: (batch, column tile)

    in_specs = [
        pl.BlockSpec((1, Cin, HW), x_map),              # x (bf16)
        pl.BlockSpec((Cmid, Cin), const2, **inv),       # folded conv1 weight (bf16)
        pl.BlockSpec((Cmid, 1), const2, **inv),         # folded conv1 bias (f32)
        pl.BlockSpec((Cmid, 1), const2, **inv),         # BN2 scale (f32)
        pl.BlockSpec((Cmid, 1), const2, **inv),         # BN2 shift (f32)
        pl.BlockSpec((HW, tile_n), kt_map),             # kron(A_h, A_w)^T column tile (bf16)
        pl.BlockSpec((Cout, Cmid), const2, **inv),      # folded conv3 weight (bf16)
        pl.BlockSpec((Cout, 1), const2, **inv),         # folded conv3 bias (f32)
    ]
    args = (x3, w1f, b1f, s2c, t2c, kt, w3f, b3f)

    if skip3 is not None:
        Cskip = skip3.shape[1]
        Ctot = Cout + Cskip
        in_specs.append(pl.BlockSpec((1, Cskip, tile_n), out_map))
        args = args + (skip3,)
    else:
        Cskip = 0
        Ctot = Cout

    vmem_bytes = _vmem_limit_bytes(Cin, Cmid, Cout, Cskip, HW, tile_n,
                                   single_buffer)

    return pl.pallas_call(
        _make_kernel(Cout, skip3 is not None),
        out_shape=jax.ShapeDtypeStruct((N, Ctot, HW4), jnp.float32),
        grid=(N, S),
        in_specs=in_specs,
        out_specs=pl.BlockSpec((1, Ctot, tile_n), out_map),
        scratch_shapes=[pltpu.VMEM((Cmid, HW), jnp.bfloat16)],  # z carry
        compiler_params=pltpu.CompilerParams(
            # Spatial axis carries the z scratch across tiles -> "arbitrary";
            # batch axis is independent -> "parallel" (megacore split over N).
            dimension_semantics=("parallel", "arbitrary"),
            vmem_limit_bytes=vmem_bytes,
        ),
    )(*args)


# ------------------------------ glue / params -------------------------------

def _interp_matrix_np(in_size, out_size):
    """Bilinear, align_corners=True interpolation matrix (out_size, in_size)."""
    if out_size == 1:
        src = np.zeros((1,), dtype=np.float64)
    else:
        src = np.arange(out_size) * (in_size - 1) / (out_size - 1)
    i0 = np.floor(src).astype(np.int64)
    i1 = np.minimum(i0 + 1, in_size - 1)
    w1 = (src - i0).astype(np.float32)
    w0 = 1.0 - w1
    A = np.zeros((out_size, in_size), dtype=np.float32)
    A[np.arange(out_size), i0] += w0
    A[np.arange(out_size), i1] += w1
    return A


@functools.lru_cache(maxsize=None)
def _upsample_kron_t_np(H, W):
    """kron(A_h, A_w)^T: (H*W, 4*H*W) so z_flat @ K^T == A_h @ z @ A_w^T flattened.

    Cached per (H, W); under jit it becomes a compile-time constant, so it is
    neither rebuilt nor re-transferred per forward call.
    """
    a_h = _interp_matrix_np(H, 2 * H)
    a_w = _interp_matrix_np(W, 2 * W)
    return np.kron(a_h, a_w).T.copy()


def init_params(key, in_channels, n_filters):
    cmid = in_channels // 4
    keys = jax.random.split(key, 16)
    rnd = lambda k, shape, s=0.1: (s * jax.random.normal(k, shape)).astype(jnp.float32)
    p = {
        "w1": rnd(keys[0], (cmid, in_channels, 1, 1)),   # PyTorch Conv2d weight layout
        "b1": rnd(keys[1], (cmid,)),
        "w3": rnd(keys[2], (n_filters, cmid, 1, 1)),
        "b3": rnd(keys[3], (n_filters,)),
    }
    for i, (name, ch) in enumerate([("n1", cmid), ("n2", cmid), ("n3", n_filters)]):
        p[name + "_g"] = (1.0 + 0.1 * jax.random.normal(keys[4 + 3 * i], (ch,))).astype(jnp.float32)
        p[name + "_b"] = rnd(keys[5 + 3 * i], (ch,))
        p[name + "_m"] = rnd(keys[6 + 3 * i], (ch,))
        p[name + "_v"] = jnp.abs(1.0 + 0.1 * jax.random.normal(keys[13 - i], (ch,))).astype(jnp.float32)
    return p


def _bn_affine(params, prefix):
    s = params[prefix + "_g"] / jnp.sqrt(params[prefix + "_v"] + BN_EPS)
    t = params[prefix + "_b"] - params[prefix + "_m"] * s
    return s, t


def decoder_block_forward(x, params, hook_stored=None, *, single_buffer=True):
    """x: (N, Cin, H, W) float32, NCHW (PyTorch layout)."""
    N, Cin, H, W = x.shape
    Cmid = params["w1"].shape[0]
    Cout = params["w3"].shape[0]
    HW = H * W
    H2, W2 = 2 * H, 2 * W
    HW4 = H2 * W2

    # Fold BN1/BN3 into the 1x1 conv weights + bias; BN2 as a per-channel affine
    # hoisted before the (row-stochastic) bilinear upsample.  Conv weights and
    # the interpolation matrix go to bf16 for the MXU; biases/affines stay f32.
    s1, t1 = _bn_affine(params, "n1")
    s2, t2 = _bn_affine(params, "n2")
    s3, t3 = _bn_affine(params, "n3")
    w1f = (params["w1"].reshape(Cmid, Cin) * s1[:, None]).astype(jnp.bfloat16)
    b1f = (params["b1"] * s1 + t1).reshape(Cmid, 1).astype(jnp.float32)
    w3f = (params["w3"].reshape(Cout, Cmid) * s3[:, None]).astype(jnp.bfloat16)
    b3f = (params["b3"] * s3 + t3).reshape(Cout, 1).astype(jnp.float32)
    s2c = s2.reshape(Cmid, 1).astype(jnp.float32)
    t2c = t2.reshape(Cmid, 1).astype(jnp.float32)

    kt = jnp.asarray(_upsample_kron_t_np(H, W)).astype(jnp.bfloat16)   # (HW, 4HW)

    tile_n = _pick_tile_n(HW4)

    x3 = x.reshape(N, Cin, HW).astype(jnp.bfloat16)   # free reshape, stays NCHW-contiguous
    skip3 = None
    if hook_stored is not None:
        Cskip = hook_stored.shape[1]
        skip3 = hook_stored.reshape(N, Cskip, HW4)

    out = _decoder_pallas(x3, w1f, b1f, s2c, t2c, kt, w3f, b3f, skip3, tile_n,
                          single_buffer)
    return out.reshape(N, out.shape[1], H2, W2)


_decoder_block_forward_jit = jax.jit(decoder_block_forward,
                                     static_argnames=("single_buffer",))


# ----------------------------- pure-JAX reference ----------------------------

def reference_forward(x, params, hook_stored=None):
    def conv1x1(x, w, b):
        return jnp.einsum("nchw,oc->nohw", x, w[:, :, 0, 0]) + b.reshape(1, -1, 1, 1)

    def bn(x, prefix):
        g = params[prefix + "_g"].reshape(1, -1, 1, 1)
        b = params[prefix + "_b"].reshape(1, -1, 1, 1)
        m = params[prefix + "_m"].reshape(1, -1, 1, 1)
        v = params[prefix + "_v"].reshape(1, -1, 1, 1)
        return (x - m) / jnp.sqrt(v + BN_EPS) * g + b

    def up(x):
        _, _, H, W = x.shape

        def interp(arr, axis, isz, osz):
            src = jnp.arange(osz) * (isz - 1) / (osz - 1)
            i0 = jnp.floor(src).astype(jnp.int32)
            i1 = jnp.minimum(i0 + 1, isz - 1)
            w1 = (src - i0).astype(arr.dtype)
            w0 = 1.0 - w1
            a0 = jnp.take(arr, i0, axis=axis)
            a1 = jnp.take(arr, i1, axis=axis)
            shp = [1] * arr.ndim
            shp[axis] = osz
            return a0 * w0.reshape(shp) + a1 * w1.reshape(shp)

        y = interp(x, 2, H, 2 * H)
        return interp(y, 3, W, 2 * W)

    y = jax.nn.relu(bn(conv1x1(x, params["w1"], params["b1"]), "n1"))
    y = jax.nn.relu(bn(up(y), "n2"))
    y = jax.nn.relu(bn(conv1x1(y, params["w3"], params["b3"]), "n3"))
    if hook_stored is not None:
        y = jnp.concatenate([y, hook_stored], axis=1)
    return y


class Hook:
    def __init__(self, stored):
        self.stored = stored


# ----------------------------------- main ------------------------------------

if __name__ == "__main__":
    N, in_channels, H, W = 2, 16, 16, 16
    n_filters = 8
    skip_channels = 8

    key = jax.random.PRNGKey(0)
    kx, kp, ks = jax.random.split(key, 3)
    x = jax.random.normal(kx, (N, in_channels, H, W), dtype=jnp.float32)
    params = init_params(kp, in_channels, n_filters)
    hook = Hook(jax.random.normal(ks, (N, skip_channels, 2 * H, 2 * W), dtype=jnp.float32))

    # bf16 matmul operands with f32 accumulation -> compare at bf16 tolerance.
    ATOL = RTOL = 1e-2

    # With skip concat (the module's normal path).  Try single-buffered
    # grid-invariant weights first; fall back to default buffering if the
    # pipeline_mode knob is rejected by this Pallas/Mosaic build.
    try:
        out = jax.block_until_ready(
            _decoder_block_forward_jit(x, params, hook_stored=hook.stored,
                                       single_buffer=True))
        sb = True
    except Exception:
        out = jax.block_until_ready(
            _decoder_block_forward_jit(x, params, hook_stored=hook.stored,
                                       single_buffer=False))
        sb = False

    ref = reference_forward(x, params, hook_stored=hook.stored)
    assert out.shape == (N, n_filters + skip_channels, 2 * H, 2 * W), out.shape
    assert jnp.allclose(out, ref, atol=ATOL, rtol=RTOL), float(jnp.max(jnp.abs(out - ref)))

    # No-hook path (hook is None) also exercised.
    out2 = jax.block_until_ready(
        _decoder_block_forward_jit(x, params, hook_stored=None, single_buffer=sb))
    ref2 = reference_forward(x, params, hook_stored=None)
    assert out2.shape == (N, n_filters, 2 * H, 2 * W), out2.shape
    assert jnp.allclose(out2, ref2, atol=ATOL, rtol=RTOL), float(jnp.max(jnp.abs(out2 - ref2)))

    print("KERNEL_OK")
</pallas_src>

<mosaic_0001>
module attributes {stable_mosaic.version = 11 : i64} {
  func.func @kernel(%arg0: i32, %arg1: i32, %arg2: memref<1x16x256xbf16, #tpu.memory_space<vmem>>, %arg3: memref<4x16xbf16, #tpu.memory_space<vmem>>, %arg4: memref<4x1xf32, #tpu.memory_space<vmem>>, %arg5: memref<4x1xf32, #tpu.memory_space<vmem>>, %arg6: memref<4x1xf32, #tpu.memory_space<vmem>>, %arg7: memref<256x512xbf16, #tpu.memory_space<vmem>>, %arg8: memref<8x4xbf16, #tpu.memory_space<vmem>>, %arg9: memref<8x1xf32, #tpu.memory_space<vmem>>, %arg10: memref<1x8x512xf32, #tpu.memory_space<vmem>>, %arg11: memref<1x16x512xf32, #tpu.memory_space<vmem>>, %arg12: memref<4x256xbf16, #tpu.memory_space<vmem>>) attributes {dimension_semantics = [#tpu.dimension_semantics<parallel>, #tpu.dimension_semantics<arbitrary>], iteration_bounds = array<i64: 2, 2>, scalar_prefetch = 0 : i64, scratch_operands = 1 : i64, tpu.core_type = #tpu.core_type<tc>, window_params = [{transform_indices = @transform_0, window_bounds = array<i64: 1, 16, 256>}, {pipeline_mode = #tpu.pipeline_mode<synchronous>, transform_indices = @transform_1, window_bounds = array<i64: 4, 16>}, {pipeline_mode = #tpu.pipeline_mode<synchronous>, transform_indices = @transform_2, window_bounds = array<i64: 4, 1>}, {pipeline_mode = #tpu.pipeline_mode<synchronous>, transform_indices = @transform_3, window_bounds = array<i64: 4, 1>}, {pipeline_mode = #tpu.pipeline_mode<synchronous>, transform_indices = @transform_4, window_bounds = array<i64: 4, 1>}, {transform_indices = @transform_5, window_bounds = array<i64: 256, 512>}, {pipeline_mode = #tpu.pipeline_mode<synchronous>, transform_indices = @transform_6, window_bounds = array<i64: 8, 4>}, {pipeline_mode = #tpu.pipeline_mode<synchronous>, transform_indices = @transform_7, window_bounds = array<i64: 8, 1>}, {transform_indices = @transform_8, window_bounds = array<i64: 1, 8, 512>}, {transform_indices = @transform_9, window_bounds = array<i64: 1, 16, 512>}]} {
    %c0_i32 = arith.constant 0 : i32
    %0 = arith.cmpi eq, %arg1, %c0_i32 : i32
    %1 = arith.extui %0 : i1 to i32
    %c0_i32_0 = arith.constant 0 : i32
    %2 = arith.cmpi ne, %1, %c0_i32_0 : i32
    scf.if %2 {
      %c0_19 = arith.constant 0 : index
      %c0_20 = arith.constant 0 : index
      %c0_21 = arith.constant 0 : index
      %24 = vector.load %arg2[%c0_19, %c0_20, %c0_21] : memref<1x16x256xbf16, #tpu.memory_space<vmem>>, vector<1x16x256xbf16>
      %25 = vector.shape_cast %24 : vector<1x16x256xbf16> to vector<16x256xbf16>
      %c0_22 = arith.constant 0 : index
      %c0_23 = arith.constant 0 : index
      %26 = vector.load %arg3[%c0_22, %c0_23] : memref<4x16xbf16, #tpu.memory_space<vmem>>, vector<4x16xbf16>
      %cst_24 = arith.constant dense<0.000000e+00> : vector<4x256xf32>
      %27 = tpu.matmul %26, %25, %cst_24 {dimension_numbers = #tpu.dot_dimension_numbers<[1], [0], [0], [1], [0, 0, 1, 1], [], []>} : vector<4x16xbf16>, vector<16x256xbf16>, vector<4x256xf32> -> vector<4x256xf32>
      %c0_25 = arith.constant 0 : index
      %c0_26 = arith.constant 0 : index
      %28 = vector.load %arg4[%c0_25, %c0_26] : memref<4x1xf32, #tpu.memory_space<vmem>>, vector<4x1xf32>
      %29 = vector.broadcast %28 : vector<4x1xf32> to vector<4x256xf32>
      %30 = arith.addf %27, %29 : vector<4x256xf32>
      %cst_27 = arith.constant 0.000000e+00 : f32
      %31 = vector.broadcast %cst_27 : f32 to vector<4x256xf32>
      %32 = arith.maximumf %30, %31 : vector<4x256xf32>
      %c0_28 = arith.constant 0 : index
      %c0_29 = arith.constant 0 : index
      %33 = vector.load %arg5[%c0_28, %c0_29] : memref<4x1xf32, #tpu.memory_space<vmem>>, vector<4x1xf32>
      %34 = vector.broadcast %33 : vector<4x1xf32> to vector<4x256xf32>
      %35 = arith.mulf %32, %34 : vector<4x256xf32>
      %c0_30 = arith.constant 0 : index
      %c0_31 = arith.constant 0 : index
      %36 = vector.load %arg6[%c0_30, %c0_31] : memref<4x1xf32, #tpu.memory_space<vmem>>, vector<4x1xf32>
      %37 = vector.broadcast %36 : vector<4x1xf32> to vector<4x256xf32>
      %38 = arith.addf %35, %37 : vector<4x256xf32>
      %39 = arith.truncf %38 : vector<4x256xf32> to vector<4x256xbf16>
      %c0_32 = arith.constant 0 : index
      %c0_33 = arith.constant 0 : index
      %40 = vector.load %arg12[%c0_32, %c0_33] : memref<4x256xbf16, #tpu.memory_space<vmem>>, vector<4x256xbf16>
      tpu.vector_store %arg12[%c0_32, %c0_33], %39 {strides = array<i32>} : memref<4x256xbf16, #tpu.memory_space<vmem>>, vector<4x256xbf16>,
    } else {
    }
    %c0 = arith.constant 0 : index
    %c0_1 = arith.constant 0 : index
    %3 = vector.load %arg12[%c0, %c0_1] : memref<4x256xbf16, #tpu.memory_space<vmem>>, vector<4x256xbf16>
    %c0_2 = arith.constant 0 : index
    %c0_3 = arith.constant 0 : index
    %4 = vector.load %arg7[%c0_2, %c0_3] : memref<256x512xbf16, #tpu.memory_space<vmem>>, vector<256x512xbf16>
    %cst = arith.constant dense<0.000000e+00> : vector<4x512xf32>
    %5 = tpu.matmul %3, %4, %cst {dimension_numbers = #tpu.dot_dimension_numbers<[1], [0], [0], [1], [0, 0, 1, 1], [], []>} : vector<4x256xbf16>, vector<256x512xbf16>, vector<4x512xf32> -> vector<4x512xf32>
    %cst_4 = arith.constant 0.000000e+00 : f32
    %6 = vector.broadcast %cst_4 : f32 to vector<4x512xf32>
    %7 = arith.maximumf %5, %6 : vector<4x512xf32>
    %c0_5 = arith.constant 0 : index
    %c0_6 = arith.constant 0 : index
    %8 = vector.load %arg8[%c0_5, %c0_6] : memref<8x4xbf16, #tpu.memory_space<vmem>>, vector<8x4xbf16>
    %9 = arith.truncf %7 : vector<4x512xf32> to vector<4x512xbf16>
    %cst_7 = arith.constant dense<0.000000e+00> : vector<8x512xf32>
    %10 = tpu.matmul %8, %9, %cst_7 {dimension_numbers = #tpu.dot_dimension_numbers<[1], [0], [0], [1], [0, 0, 1, 1], [], []>} : vector<8x4xbf16>, vector<4x512xbf16>, vector<8x512xf32> -> vector<8x512xf32>
    %c0_8 = arith.constant 0 : index
    %c0_9 = arith.constant 0 : index
    %11 = vector.load %arg9[%c0_8, %c0_9] : memref<8x1xf32, #tpu.memory_space<vmem>>, vector<8x1xf32>
    %12 = vector.broadcast %11 : vector<8x1xf32> to vector<8x512xf32>
    %13 = arith.addf %10, %12 : vector<8x512xf32>
    %cst_10 = arith.constant 0.000000e+00 : f32
    %14 = vector.broadcast %cst_10 : f32 to vector<8x512xf32>
    %15 = arith.maximumf %13, %14 : vector<8x512xf32>
    %c0_11 = arith.constant 0 : index
    %c0_12 = arith.constant 0 : index
    %c0_13 = arith.constant 0 : index
    %16 = vector.load %arg11[%c0_11, %c0_12, %c0_13] : memref<1x16x512xf32, #tpu.memory_space<vmem>>, vector<1x8x512xf32>
    %17 = vector.shape_cast %16 : vector<1x8x512xf32> to vector<8x512xf32>
    %18 = vector.shape_cast %15 : vector<8x512xf32> to vector<1x8x512xf32>
    tpu.vector_store %arg11[%c0_11, %c0_12, %c0_13], %18 {strides = array<i32>} : memref<1x16x512xf32, #tpu.memory_space<vmem>>, vector<1x8x512xf32>,
    %c0_14 = arith.constant 0 : index
    %c0_15 = arith.constant 0 : index
    %c0_16 = arith.constant 0 : index
    %19 = vector.load %arg10[%c0_14, %c0_15, %c0_16] : memref<1x8x512xf32, #tpu.memory_space<vmem>>, vector<1x8x512xf32>
    %20 = vector.shape_cast %19 : vector<1x8x512xf32> to vector<8x512xf32>
    %c0_17 = arith.constant 0 : index
    %c8 = arith.constant 8 : index
    %c0_18 = arith.constant 0 : index
    %21 = vector.load %arg11[%c0_17, %c8, %c0_18] : memref<1x16x512xf32, #tpu.memory_space<vmem>>, vector<1x8x512xf32>
    %22 = vector.shape_cast %21 : vector<1x8x512xf32> to vector<8x512xf32>
    %23 = vector.shape_cast %20 : vector<8x512xf32> to vector<1x8x512xf32>
    tpu.vector_store %arg11[%c0_17, %c8, %c0_18], %23 {strides = array<i32>} : memref<1x16x512xf32, #tpu.memory_space<vmem>>, vector<1x8x512xf32>,
    return
  }
  func.func @transform_0(%arg0: i32, %arg1: i32) -> (i32, i32, i32) {
    %c0_i32 = arith.constant 0 : i32
    %c0_i32_0 = arith.constant 0 : i32
    %c0_i32_1 = arith.constant 0 : i32
    return %arg0, %c0_i32, %c0_i32_0 : i32, i32, i32
  }
  func.func @transform_1(%arg0: i32, %arg1: i32) -> (i32, i32) {
    %c0_i32 = arith.constant 0 : i32
    %c0_i32_0 = arith.constant 0 : i32
    %c0_i32_1 = arith.constant 0 : i32
    return %c0_i32, %c0_i32_0 : i32, i32
  }
  func.func @transform_2(%arg0: i32, %arg1: i32) -> (i32, i32) {
    %c0_i32 = arith.constant 0 : i32
    %c0_i32_0 = arith.constant 0 : i32
    %c0_i32_1 = arith.constant 0 : i32
    return %c0_i32, %c0_i32_0 : i32, i32
  }
  func.func @transform_3(%arg0: i32, %arg1: i32) -> (i32, i32) {
    %c0_i32 = arith.constant 0 : i32
    %c0_i32_0 = arith.constant 0 : i32
    %c0_i32_1 = arith.constant 0 : i32
    return %c0_i32, %c0_i32_0 : i32, i32
  }
  func.func @transform_4(%arg0: i32, %arg1: i32) -> (i32, i32) {
    %c0_i32 = arith.constant 0 : i32
    %c0_i32_0 = arith.constant 0 : i32
    %c0_i32_1 = arith.constant 0 : i32
    return %c0_i32, %c0_i32_0 : i32, i32
  }
  func.func @transform_5(%arg0: i32, %arg1: i32) -> (i32, i32) {
    %c0_i32 = arith.constant 0 : i32
    %c0_i32_0 = arith.constant 0 : i32
    return %c0_i32, %arg1 : i32, i32
  }
  func.func @transform_6(%arg0: i32, %arg1: i32) -> (i32, i32) {
    %c0_i32 = arith.constant 0 : i32
    %c0_i32_0 = arith.constant 0 : i32
    %c0_i32_1 = arith.constant 0 : i32
    return %c0_i32, %c0_i32_0 : i32, i32
  }
  func.func @transform_7(%arg0: i32, %arg1: i32) -> (i32, i32) {
    %c0_i32 = arith.constant 0 : i32
    %c0_i32_0 = arith.constant 0 : i32
    %c0_i32_1 = arith.constant 0 : i32
    return %c0_i32, %c0_i32_0 : i32, i32
  }
  func.func @transform_8(%arg0: i32, %arg1: i32) -> (i32, i32, i32) {
    %c0_i32 = arith.constant 0 : i32
    %c0_i32_0 = arith.constant 0 : i32
    return %arg0, %c0_i32, %arg1 : i32, i32, i32
  }
  func.func @transform_9(%arg0: i32, %arg1: i32) -> (i32, i32, i32) {
    %c0_i32 = arith.constant 0 : i32
    %c0_i32_0 = arith.constant 0 : i32
    return %arg0, %c0_i32, %arg1 : i32, i32, i32
  }
}

module attributes {stable_mosaic.version = 11 : i64} {
  func.func @kernel(%arg0: i32, %arg1: i32, %arg2: memref<1x16x256xbf16, #tpu.memory_space<vmem>>, %arg3: memref<4x16xbf16, #tpu.memory_space<vmem>>, %arg4: memref<4x1xf32, #tpu.memory_space<vmem>>, %arg5: memref<4x1xf32, #tpu.memory_space<vmem>>, %arg6: memref<4x1xf32, #tpu.memory_space<vmem>>, %arg7: memref<256x512xbf16, #tpu.memory_space<vmem>>, %arg8: memref<8x4xbf16, #tpu.memory_space<vmem>>, %arg9: memref<8x1xf32, #tpu.memory_space<vmem>>, %arg10: memref<1x8x512xf32, #tpu.memory_space<vmem>>, %arg11: memref<1x16x512xf32, #tpu.memory_space<vmem>>, %arg12: memref<4x256xbf16, #tpu.memory_space<vmem>>) attributes {dimension_semantics = [#tpu.dimension_semantics<parallel>, #tpu.dimension_semantics<arbitrary>], iteration_bounds = array<i64: 2, 2>, scalar_prefetch = 0 : i64, scratch_operands = 1 : i64, tpu.core_type = #tpu.core_type<tc>, window_params = [{transform_indices = @transform_0, window_bounds = array<i64: 1, 16, 256>}, {pipeline_mode = #tpu.pipeline_mode<synchronous>, transform_indices = @transform_1, window_bounds = array<i64: 4, 16>}, {pipeline_mode = #tpu.pipeline_mode<synchronous>, transform_indices = @transform_2, window_bounds = array<i64: 4, 1>}, {pipeline_mode = #tpu.pipeline_mode<synchronous>, transform_indices = @transform_3, window_bounds = array<i64: 4, 1>}, {pipeline_mode = #tpu.pipeline_mode<synchronous>, transform_indices = @transform_4, window_bounds = array<i64: 4, 1>}, {transform_indices = @transform_5, window_bounds = array<i64: 256, 512>}, {pipeline_mode = #tpu.pipeline_mode<synchronous>, transform_indices = @transform_6, window_bounds = array<i64: 8, 4>}, {pipeline_mode = #tpu.pipeline_mode<synchronous>, transform_indices = @transform_7, window_bounds = array<i64: 8, 1>}, {transform_indices = @transform_8, window_bounds = array<i64: 1, 8, 512>}, {transform_indices = @transform_9, window_bounds = array<i64: 1, 16, 512>}]} {
    %c0_i32 = arith.constant 0 : i32
    %0 = arith.cmpi eq, %arg1, %c0_i32 : i32
    %1 = arith.extui %0 : i1 to i32
    %c0_i32_0 = arith.constant 0 : i32
    %2 = arith.cmpi ne, %1, %c0_i32_0 : i32
    scf.if %2 {
      %c0_19 = arith.constant 0 : index
      %c0_20 = arith.constant 0 : index
      %c0_21 = arith.constant 0 : index
      %24 = vector.load %arg2[%c0_19, %c0_20, %c0_21] : memref<1x16x256xbf16, #tpu.memory_space<vmem>>, vector<1x16x256xbf16>
      %25 = vector.shape_cast %24 : vector<1x16x256xbf16> to vector<16x256xbf16>
      %c0_22 = arith.constant 0 : index
      %c0_23 = arith.constant 0 : index
      %26 = vector.load %arg3[%c0_22, %c0_23] : memref<4x16xbf16, #tpu.memory_space<vmem>>, vector<4x16xbf16>
      %cst_24 = arith.constant dense<0.000000e+00> : vector<4x256xf32>
      %27 = tpu.matmul %26, %25, %cst_24 {dimension_numbers = #tpu.dot_dimension_numbers<[1], [0], [0], [1], [0, 0, 1, 1], [], []>} : vector<4x16xbf16>, vector<16x256xbf16>, vector<4x256xf32> -> vector<4x256xf32>
      %c0_25 = arith.constant 0 : index
      %c0_26 = arith.constant 0 : index
      %28 = vector.load %arg4[%c0_25, %c0_26] : memref<4x1xf32, #tpu.memory_space<vmem>>, vector<4x1xf32>
      %29 = vector.broadcast %28 : vector<4x1xf32> to vector<4x256xf32>
      %30 = arith.addf %27, %29 : vector<4x256xf32>
      %cst_27 = arith.constant 0.000000e+00 : f32
      %31 = vector.broadcast %cst_27 : f32 to vector<4x256xf32>
      %32 = arith.maximumf %30, %31 : vector<4x256xf32>
      %c0_28 = arith.constant 0 : index
      %c0_29 = arith.constant 0 : index
      %33 = vector.load %arg5[%c0_28, %c0_29] : memref<4x1xf32, #tpu.memory_space<vmem>>, vector<4x1xf32>
      %34 = vector.broadcast %33 : vector<4x1xf32> to vector<4x256xf32>
      %35 = arith.mulf %32, %34 : vector<4x256xf32>
      %c0_30 = arith.constant 0 : index
      %c0_31 = arith.constant 0 : index
      %36 = vector.load %arg6[%c0_30, %c0_31] : memref<4x1xf32, #tpu.memory_space<vmem>>, vector<4x1xf32>
      %37 = vector.broadcast %36 : vector<4x1xf32> to vector<4x256xf32>
      %38 = arith.addf %35, %37 : vector<4x256xf32>
      %39 = arith.truncf %38 : vector<4x256xf32> to vector<4x256xbf16>
      %c0_32 = arith.constant 0 : index
      %c0_33 = arith.constant 0 : index
      %40 = vector.load %arg12[%c0_32, %c0_33] : memref<4x256xbf16, #tpu.memory_space<vmem>>, vector<4x256xbf16>
      tpu.vector_store %arg12[%c0_32, %c0_33], %39 {strides = array<i32>} : memref<4x256xbf16, #tpu.memory_space<vmem>>, vector<4x256xbf16>,
    } else {
    }
    %c0 = arith.constant 0 : index
    %c0_1 = arith.constant 0 : index
    %3 = vector.load %arg12[%c0, %c0_1] : memref<4x256xbf16, #tpu.memory_space<vmem>>, vector<4x256xbf16>
    %c0_2 = arith.constant 0 : index
    %c0_3 = arith.constant 0 : index
    %4 = vector.load %arg7[%c0_2, %c0_3] : memref<256x512xbf16, #tpu.memory_space<vmem>>, vector<256x512xbf16>
    %cst = arith.constant dense<0.000000e+00> : vector<4x512xf32>
    %5 = tpu.matmul %3, %4, %cst {dimension_numbers = #tpu.dot_dimension_numbers<[1], [0], [0], [1], [0, 0, 1, 1], [], []>} : vector<4x256xbf16>, vector<256x512xbf16>, vector<4x512xf32> -> vector<4x512xf32>
    %cst_4 = arith.constant 0.000000e+00 : f32
    %6 = vector.broadcast %cst_4 : f32 to vector<4x512xf32>
    %7 = arith.maximumf %5, %6 : vector<4x512xf32>
    %c0_5 = arith.constant 0 : index
    %c0_6 = arith.constant 0 : index
    %8 = vector.load %arg8[%c0_5, %c0_6] : memref<8x4xbf16, #tpu.memory_space<vmem>>, vector<8x4xbf16>
    %9 = arith.truncf %7 : vector<4x512xf32> to vector<4x512xbf16>
    %cst_7 = arith.constant dense<0.000000e+00> : vector<8x512xf32>
    %10 = tpu.matmul %8, %9, %cst_7 {dimension_numbers = #tpu.dot_dimension_numbers<[1], [0], [0], [1], [0, 0, 1, 1], [], []>} : vector<8x4xbf16>, vector<4x512xbf16>, vector<8x512xf32> -> vector<8x512xf32>
    %c0_8 = arith.constant 0 : index
    %c0_9 = arith.constant 0 : index
    %11 = vector.load %arg9[%c0_8, %c0_9] : memref<8x1xf32, #tpu.memory_space<vmem>>, vector<8x1xf32>
    %12 = vector.broadcast %11 : vector<8x1xf32> to vector<8x512xf32>
    %13 = arith.addf %10, %12 : vector<8x512xf32>
    %cst_10 = arith.constant 0.000000e+00 : f32
    %14 = vector.broadcast %cst_10 : f32 to vector<8x512xf32>
    %15 = arith.maximumf %13, %14 : vector<8x512xf32>
    %c0_11 = arith.constant 0 : index
    %c0_12 = arith.constant 0 : index
    %c0_13 = arith.constant 0 : index
    %16 = vector.load %arg11[%c0_11, %c0_12, %c0_13] : memref<1x16x512xf32, #tpu.memory_space<vmem>>, vector<1x8x512xf32>
    %17 = vector.shape_cast %16 : vector<1x8x512xf32> to vector<8x512xf32>
    %18 = vector.shape_cast %15 : vector<8x512xf32> to vector<1x8x512xf32>
    tpu.vector_store %arg11[%c0_11, %c0_12, %c0_13], %18 {strides = array<i32>} : memref<1x16x512xf32, #tpu.memory_space<vmem>>, vector<1x8x512xf32>,
    %c0_14 = arith.constant 0 : index
    %c0_15 = arith.constant 0 : index
    %c0_16 = arith.constant 0 : index
    %19 = vector.load %arg10[%c0_14, %c0_15, %c0_16] : memref<1x8x512xf32, #tpu.memory_space<vmem>>, vector<1x8x512xf32>
    %20 = vector.shape_cast %19 : vector<1x8x512xf32> to vector<8x512xf32>
    %c0_17 = arith.constant 0 : index
    %c8 = arith.constant 8 : index
    %c0_18 = arith.constant 0 : index
    %21 = vector.load %arg11[%c0_17, %c8, %c0_18] : memref<1x16x512xf32, #tpu.memory_space<vmem>>, vector<1x8x512xf32>
    %22 = vector.shape_cast %21 : vector<1x8x512xf32> to vector<8x512xf32>
    %23 = vector.shape_cast %20 : vector<8x512xf32> to vector<1x8x512xf32>
    tpu.vector_store %arg11[%c0_17, %c8, %c0_18], %23 {strides = array<i32>} : memref<1x16x512xf32, #tpu.memory_space<vmem>>, vector<1x8x512xf32>,
    return
  }
  func.func @transform_0(%arg0: i32, %arg1: i32) -> (i32, i32, i32) {
    %c0_i32 = arith.constant 0 : i32
    %c0_i32_0 = arith.constant 0 : i32
    %c0_i32_1 = arith.constant 0 : i32
    return %arg0, %c0_i32, %c0_i32_0 : i32, i32, i32
  }
  func.func @transform_1(%arg0: i32, %arg1: i32) -> (i32, i32) {
    %c0_i32 = arith.constant 0 : i32
    %c0_i32_0 = arith.constant 0 : i32
    %c0_i32_1 = arith.constant 0 : i32
    return %c0_i32, %c0_i32_0 : i32, i32
  }
  func.func @transform_2(%arg0: i32, %arg1: i32) -> (i32, i32) {
    %c0_i32 = arith.constant 0 : i32
    %c0_i32_0 = arith.constant 0 : i32
    %c0_i32_1 = arith.constant 0 : i32
    return %c0_i32, %c0_i32_0 : i32, i32
  }
  func.func @transform_3(%arg0: i32, %arg1: i32) -> (i32, i32) {
    %c0_i32 = arith.constant 0 : i32
    %c0_i32_0 = arith.constant 0 : i32
    %c0_i32_1 = arith.constant 0 : i32
    return %c0_i32, %c0_i32_0 : i32, i32
  }
  func.func @transform_4(%arg0: i32, %arg1: i32) -> (i32, i32) {
    %c0_i32 = arith.constant 0 : i32
    %c0_i32_0 = arith.constant 0 : i32
    %c0_i32_1 = arith.constant 0 : i32
    return %c0_i32, %c0_i32_0 : i32, i32
  }
  func.func @transform_5(%arg0: i32, %arg1: i32) -> (i32, i32) {
    %c0_i32 = arith.constant 0 : i32
    %c0_i32_0 = arith.constant 0 : i32
    return %c0_i32, %arg1 : i32, i32
  }
  func.func @transform_6(%arg0: i32, %arg1: i32) -> (i32, i32) {
    %c0_i32 = arith.constant 0 : i32
    %c0_i32_0 = arith.constant 0 : i32
    %c0_i32_1 = arith.constant 0 : i32
    return %c0_i32, %c0_i32_0 : i32, i32
  }
  func.func @transform_7(%arg0: i32, %arg1: i32) -> (i32, i32) {
    %c0_i32 = arith.constant 0 : i32
    %c0_i32_0 = arith.constant 0 : i32
    %c0_i32_1 = arith.constant 0 : i32
    return %c0_i32, %c0_i32_0 : i32, i32
  }
  func.func @transform_8(%arg0: i32, %arg1: i32) -> (i32, i32, i32) {
    %c0_i32 = arith.constant 0 : i32
    %c0_i32_0 = arith.constant 0 : i32
    return %arg0, %c0_i32, %arg1 : i32, i32, i32
  }
  func.func @transform_9(%arg0: i32, %arg1: i32) -> (i32, i32, i32) {
    %c0_i32 = arith.constant 0 : i32
    %c0_i32_0 = arith.constant 0 : i32
    return %arg0, %c0_i32, %arg1 : i32, i32, i32
  }
}

</mosaic_0001>

<llo_original>
// kernel: decoder_block_forward.1
$region0: #{decoder_block_forward.1}
  #allocation0 [shape = 'u32[]', space=smem, size = 0x4, offset = 0x4, fixed_abs, tag = 'smem constant byte address 0x4 - core index']
  #allocation1 [shape = 'u32[72,128]{1,0:T(1,128)}', space=vmem, size = 0x9000, scoped, tag = 'internal scratch']
  #allocation2 [shape = 'bf16[4,256]{1,0:T(4,128)(2,1)}', space=vmem, size = 0x800, scoped, tag = 'scratch operand']
  %s0 = inlined_call_operand.vmem [shape: bf16[2,16,256], index: 0, kind: input, shape index: {}]
  %s1 = inlined_call_operand.vmem [shape: bf16[4,16], index: 1, kind: input, shape index: {}]
  %s2 = inlined_call_operand.vmem [shape: f32[4,1], index: 2, kind: input, shape index: {}]
  %s3 = inlined_call_operand.vmem [shape: f32[4,1], index: 3, kind: input, shape index: {}]
  %s4 = inlined_call_operand.vmem [shape: f32[4,1], index: 4, kind: input, shape index: {}]
  %s5 = inlined_call_operand.vmem [shape: bf16[256,1024], index: 5, kind: input, shape index: {}]
  %s6 = inlined_call_operand.vmem [shape: bf16[8,4], index: 6, kind: input, shape index: {}]
  %s7 = inlined_call_operand.vmem [shape: f32[8,1], index: 7, kind: input, shape index: {}]
  %s8 = inlined_call_operand.vmem [shape: f32[2,8,1024], index: 8, kind: input, shape index: {}]
  %s9 = inlined_call_operand.vmem [shape: f32[2,16,1024], index: 9, kind: output, shape index: {}]
  %s10 = sld [smem:[#allocation0]]
  $region115: #{decoder_block_forward.1} parent=0
    _
  %s12 = ssub.s32 1, %s10
  %s13 = scalar_select 0, %s12, %s10
  $region1: #{decoder_block_forward.1} parent=0
    #allocation3 [shape = 'u8[524288]{0}', space=vmem, size = 0x80000, scoped, tag = 'input window, operand 5']
    #allocation4 [shape = 'u8[65536]{0}', space=vmem, size = 0x10000, scoped, tag = 'output window, operand 0']
    loop: start=0, step=1, limit=6
    $region2: #{decoder_block_forward.1} parent=1 // loop_pre_header
      _
    $region3: #{decoder_block_forward.1} parent=1 // loop_header
      %s15 = sphi 0, %s19
      %p16 = scmp.ge.s32.totalorder %s15, 6
      %s22 = sphi 0, %s34
      %s23 = sphi 0, %s30
      %s24 = sphi 0, %s22
      %s25 = sphi 0, %s23
      %s26 = sphi 0, %s24
      %s27 = sphi 0, %s25
      %s37 = sphi 0, %s39
      %s40 = sphi 0, %s37
      %s41 = sphi 0, %s40
      %s57 = sphi 0, %s41
      %s61 = sphi 0, %s61
      %s63 = sphi 0, %s61
      %s64 = sphi 0, %s63
      %s78 = sphi 0, %s64
      %s82 = sphi 0, %s82
      %s84 = sphi 0, %s82
      %s85 = sphi 0, %s84
      %s99 = sphi 0, %s85
      %s103 = sphi 0, %s103
      %s105 = sphi 0, %s103
      %s106 = sphi 0, %s105
      %s120 = sphi 0, %s106
      %s124 = sphi 0, %s124
      %s126 = sphi 0, %s124
      %s127 = sphi 0, %s126
      %s141 = sphi 0, %s127
      %s147 = sphi 0, %s149
      %s150 = sphi 0, %s147
      %s151 = sphi 0, %s150
      %s167 = sphi 0, %s151
      %s171 = sphi 0, %s171
      %s173 = sphi 0, %s171
      %s174 = sphi 0, %s173
      %s188 = sphi 0, %s174
      %s192 = sphi 0, %s192
      %s194 = sphi 0, %s192
      %s195 = sphi 0, %s194
      %s209 = sphi 0, %s195
      %s217 = sphi 0, %s219
      %s220 = sphi 0, %s217
      %s221 = sphi 0, %s220
      %s237 = sphi 0, %s221
      %s245 = sphi 0, %s247
      %s248 = sphi 0, %s245
      %s249 = sphi 0, %s248
      %s265 = sphi 0, %s249
    $region4: #{decoder_block_forward.1} parent=1 // loop_header_branch
      %18 = sbr.rel (%p16) target = $region8
    $region5: #{decoder_block_forward.1} parent=1 // loop_body
      %s20 = ssub.s32 %s15, 1
      %s21 = ssub.s32 %s15, 2
      %s28 = sadd.s32 1, %s23
      %p29 = scmp.ge.s32.totalorder %s28, 2
      %s30 = scalar_select %p29, 0, %s28
      %s31 = sadd.s32 1, %s22
      %s32 = scalar_select %p29, %s31, %s22
      %p33 = scmp.ge.s32.totalorder %s32, 2
      %s34 = scalar_select %p33, 0, %s32
      %s35 = ssub.s32 %s22, %s34
      %p36 = scmp.eq.s32.totalorder %s35, 0
      %s38 = sadd.s32 %s37, 1
      %s39 = scalar_select %p36, %s37, %s38
      %p42 = pneg %p36
      %p43 = scmp.eq.s32.totalorder %s15, 3
      %p44 = por %p42, %p43
      %p45 = scmp.ne.s32.totalorder %s37, %s40
      %p46 = scmp.eq.s32.totalorder %s15, 0
      %p47 = por %p45, %p46
      %p48 = scmp.ne.s32.totalorder %s37, %s40
      %p49 = scmp.eq.s32.totalorder %s20, 3
      %p50 = por %p48, %p49
      %p51 = scmp.ne.s32.totalorder %s40, %s41
      %p52 = scmp.eq.s32.totalorder %s20, 0
      %p53 = por %p51, %p52
      %p54 = scmp.ne.s32.totalorder %s40, %s41
      %p55 = scmp.eq.s32.totalorder %s21, 3
      %p56 = por %p54, %p55
      %p58 = scmp.ne.s32.totalorder %s41, %s57
      %p59 = scmp.eq.s32.totalorder %s21, 0
      %p60 = por %p58, %p59
      %s62 = sadd.s32 %s61, 1
      %p65 = scmp.eq.s32.totalorder %s15, 3
      %p66 = scmp.ne.s32.totalorder %s61, %s63
      %p67 = scmp.eq.s32.totalorder %s15, 0
      %p68 = por %p66, %p67
      %p69 = scmp.ne.s32.totalorder %s61, %s63
      %p70 = scmp.eq.s32.totalorder %s20, 3
      %p71 = por %p69, %p70
      %p72 = scmp.ne.s32.totalorder %s63, %s64
      %p73 = scmp.eq.s32.totalorder %s20, 0
      %p74 = por %p72, %p73
      %p75 = scmp.ne.s32.totalorder %s63, %s64
      %p76 = scmp.eq.s32.totalorder %s21, 3
      %p77 = por %p75, %p76
      %p79 = scmp.ne.s32.totalorder %s64, %s78
      %p80 = scmp.eq.s32.totalorder %s21, 0
      %p81 = por %p79, %p80
      %s83 = sadd.s32 %s82, 1
      %p86 = scmp.eq.s32.totalorder %s15, 3
      %p87 = scmp.ne.s32.totalorder %s82, %s84
      %p88 = scmp.eq.s32.totalorder %s15, 0
      %p89 = por %p87, %p88
      %p90 = scmp.ne.s32.totalorder %s82, %s84
      %p91 = scmp.eq.s32.totalorder %s20, 3
      %p92 = por %p90, %p91
      %p93 = scmp.ne.s32.totalorder %s84, %s85
      %p94 = scmp.eq.s32.totalorder %s20, 0
      %p95 = por %p93, %p94
      %p96 = scmp.ne.s32.totalorder %s84, %s85
      %p97 = scmp.eq.s32.totalorder %s21, 3
      %p98 = por %p96, %p97
      %p100 = scmp.ne.s32.totalorder %s85, %s99
      %p101 = scmp.eq.s32.totalorder %s21, 0
      %p102 = por %p100, %p101
      %s104 = sadd.s32 %s103, 1
      %p107 = scmp.eq.s32.totalorder %s15, 3
      %p108 = scmp.ne.s32.totalorder %s103, %s105
      %p109 = scmp.eq.s32.totalorder %s15, 0
      %p110 = por %p108, %p109
      %p111 = scmp.ne.s32.totalorder %s103, %s105
      %p112 = scmp.eq.s32.totalorder %s20, 3
      %p113 = por %p111, %p112
      %p114 = scmp.ne.s32.totalorder %s105, %s106
      %p115 = scmp.eq.s32.totalorder %s20, 0
      %p116 = por %p114, %p115
      %p117 = scmp.ne.s32.totalorder %s105, %s106
      %p118 = scmp.eq.s32.totalorder %s21, 3
      %p119 = por %p117, %p118
      %p121 = scmp.ne.s32.totalorder %s106, %s120
      %p122 = scmp.eq.s32.totalorder %s21, 0
      %p123 = por %p121, %p122
      %s125 = sadd.s32 %s124, 1
      %p128 = scmp.eq.s32.totalorder %s15, 3
      %p129 = scmp.ne.s32.totalorder %s124, %s126
      %p130 = scmp.eq.s32.totalorder %s15, 0
      %p131 = por %p129, %p130
      %p132 = scmp.ne.s32.totalorder %s124, %s126
      %p133 = scmp.eq.s32.totalorder %s20, 3
      %p134 = por %p132, %p133
      %p135 = scmp.ne.s32.totalorder %s126, %s127
      %p136 = scmp.eq.s32.totalorder %s20, 0
      %p137 = por %p135, %p136
      %p138 = scmp.ne.s32.totalorder %s126, %s127
      %p139 = scmp.eq.s32.totalorder %s21, 3
      %p140 = por %p138, %p139
      %p142 = scmp.ne.s32.totalorder %s127, %s141
      %p143 = scmp.eq.s32.totalorder %s21, 0
      %p144 = por %p142, %p143
      %s145 = ssub.s32 %s23, %s30
      %p146 = scmp.eq.s32.totalorder %s145, 0
      %s148 = sadd.s32 %s147, 1
      %s149 = scalar_select %p146, %s147, %s148
      %p152 = pneg %p146
      %p153 = scmp.eq.s32.totalorder %s15, 3
      %p154 = por %p152, %p153
      %p155 = scmp.ne.s32.totalorder %s147, %s150
      %p156 = scmp.eq.s32.totalorder %s15, 0
      %p157 = por %p155, %p156
      %p158 = scmp.ne.s32.totalorder %s147, %s150
      %p159 = scmp.eq.s32.totalorder %s20, 3
      %p160 = por %p158, %p159
      %p161 = scmp.ne.s32.totalorder %s150, %s151
      %p162 = scmp.eq.s32.totalorder %s20, 0
      %p163 = por %p161, %p162
      %p164 = scmp.ne.s32.totalorder %s150, %s151
      %p165 = scmp.eq.s32.totalorder %s21, 3
      %p166 = por %p164, %p165
      %p168 = scmp.ne.s32.totalorder %s151, %s167
      %p169 = scmp.eq.s32.totalorder %s21, 0
      %p170 = por %p168, %p169
      %s172 = sadd.s32 %s171, 1
      %p175 = scmp.eq.s32.totalorder %s15, 3
      %p176 = scmp.ne.s32.totalorder %s171, %s173
      %p177 = scmp.eq.s32.totalorder %s15, 0
      %p178 = por %p176, %p177
      %p179 = scmp.ne.s32.totalorder %s171, %s173
      %p180 = scmp.eq.s32.totalorder %s20, 3
      %p181 = por %p179, %p180
      %p182 = scmp.ne.s32.totalorder %s173, %s174
      %p183 = scmp.eq.s32.totalorder %s20, 0
      %p184 = por %p182, %p183
      %p185 = scmp.ne.s32.totalorder %s173, %s174
      %p186 = scmp.eq.s32.totalorder %s21, 3
      %p187 = por %p185, %p186
      %p189 = scmp.ne.s32.totalorder %s174, %s188
      %p190 = scmp.eq.s32.totalorder %s21, 0
      %p191 = por %p189, %p190
      %s193 = sadd.s32 %s192, 1
      %p196 = scmp.eq.s32.totalorder %s15, 3
      %p197 = scmp.ne.s32.totalorder %s192, %s194
      %p198 = scmp.eq.s32.totalorder %s15, 0
      %p199 = por %p197, %p198
      %p200 = scmp.ne.s32.totalorder %s192, %s194
      %p201 = scmp.eq.s32.totalorder %s20, 3
      %p202 = por %p200, %p201
      %p203 = scmp.ne.s32.totalorder %s194, %s195
      %p204 = scmp.eq.s32.totalorder %s20, 0
      %p205 = por %p203, %p204
      %p206 = scmp.ne.s32.totalorder %s194, %s195
      %p207 = scmp.eq.s32.totalorder %s21, 3
      %p208 = por %p206, %p207
      %p210 = scmp.ne.s32.totalorder %s195, %s209
      %p211 = scmp.eq.s32.totalorder %s21, 0
      %p212 = por %p210, %p211
      %s213 = ssub.s32 %s22, %s34
      %s214 = ssub.s32 %s23, %s30
      %s215 = sor.u32 %s213, %s214
      %p216 = scmp.eq.s32.totalorder %s215, 0
      %s218 = sadd.s32 %s217, 1
      %s219 = scalar_select %p216, %s217, %s218
      %p222 = pneg %p216
      %p223 = scmp.eq.s32.totalorder %s15, 3
      %p224 = por %p222, %p223
      %p225 = scmp.ne.s32.totalorder %s217, %s220
      %p226 = scmp.eq.s32.totalorder %s15, 0
      %p227 = por %p225, %p226
      %p228 = scmp.ne.s32.totalorder %s217, %s220
      %p229 = scmp.eq.s32.totalorder %s20, 3
      %p230 = por %p228, %p229
      %p231 = scmp.ne.s32.totalorder %s220, %s221
      %p232 = scmp.eq.s32.totalorder %s20, 0
      %p233 = por %p231, %p232
      %p234 = scmp.ne.s32.totalorder %s220, %s221
      %p235 = scmp.eq.s32.totalorder %s21, 3
      %p236 = por %p234, %p235
      %p238 = scmp.ne.s32.totalorder %s221, %s237
      %p239 = scmp.eq.s32.totalorder %s21, 0
      %p240 = por %p238, %p239
      %s241 = ssub.s32 %s22, %s34
      %s242 = ssub.s32 %s23, %s30
      %s243 = sor.u32 %s241, %s242
      %p244 = scmp.eq.s32.totalorder %s243, 0
      %s246 = sadd.s32 %s245, 1
      %s247 = scalar_select %p244, %s245, %s246
      %p250 = pneg %p244
      %p251 = scmp.eq.s32.totalorder %s15, 3
      %p252 = por %p250, %p251
      %p253 = scmp.ne.s32.totalorder %s245, %s248
      %p254 = scmp.eq.s32.totalorder %s15, 0
      %p255 = por %p253, %p254
      %p256 = scmp.ne.s32.totalorder %s245, %s248
      %p257 = scmp.eq.s32.totalorder %s20, 3
      %p258 = por %p256, %p257
      %p259 = scmp.ne.s32.totalorder %s248, %s249
      %p260 = scmp.eq.s32.totalorder %s20, 0
      %p261 = por %p259, %p260
      %p262 = scmp.ne.s32.totalorder %s248, %s249
      %p263 = scmp.eq.s32.totalorder %s21, 3
      %p264 = por %p262, %p263
      %p266 = scmp.ne.s32.totalorder %s249, %s265
      %p267 = scmp.eq.s32.totalorder %s21, 0
      %p268 = por %p266, %p267
      %p269 = scmp.le.s32.totalorder 1, %s15
      %p270 = scmp.lt.s32.totalorder %s15, 5
      %p271 = pnand %p269, %p270
      %p272 = pneg %p271
      // Predicated region
      $region9: #{decoder_block_forward.1} parent=5 // pred_check
        _
      $region10: #{decoder_block_forward.1} parent=5 // pred_check_branch
        %274 = sbr.rel (%p271) target = $region12
      $region11: #{decoder_block_forward.1} parent=5 // pred_region
        %s275 = ssub.s32 %s15, 1
        // Predicated region
        $region13: #{decoder_block_forward.1} parent=11 // pred_check
          %p276 = pneg %p74
        $region14: #{decoder_block_forward.1} parent=11 // pred_check_branch
          %278 = sbr.rel (%p276) target = $region16
        $region15: #{decoder_block_forward.1} parent=11 // pred_region
          _
        $region16: #{decoder_block_forward.1} parent=11 // pred_fallthru
          _
        // Predicated region
        $region17: #{decoder_block_forward.1} parent=11 // pred_check
          %p279 = pneg %p95
        $region18: #{decoder_block_forward.1} parent=11 // pred_check_branch
          %281 = sbr.rel (%p279) target = $region20
        $region19: #{decoder_block_forward.1} parent=11 // pred_region
          _
        $region20: #{decoder_block_forward.1} parent=11 // pred_fallthru
          _
        // Predicated region
        $region21: #{decoder_block_forward.1} parent=11 // pred_check
          %p282 = pneg %p116
        $region22: #{decoder_block_forward.1} parent=11 // pred_check_branch
          %284 = sbr.rel (%p282) target = $region24
        $region23: #{decoder_block_forward.1} parent=11 // pred_region
          _
        $region24: #{decoder_block_forward.1} parent=11 // pred_fallthru
          _
        // Predicated region
        $region25: #{decoder_block_forward.1} parent=11 // pred_check
          %p285 = pneg %p137
        $region26: #{decoder_block_forward.1} parent=11 // pred_check_branch
          %287 = sbr.rel (%p285) target = $region28
        $region27: #{decoder_block_forward.1} parent=11 // pred_region
          _
        $region28: #{decoder_block_forward.1} parent=11 // pred_fallthru
          _
        // Predicated region
        $region29: #{decoder_block_forward.1} parent=11 // pred_check
          %p288 = pneg %p184
        $region30: #{decoder_block_forward.1} parent=11 // pred_check_branch
          %290 = sbr.rel (%p288) target = $region32
        $region31: #{decoder_block_forward.1} parent=11 // pred_region
          _
        $region32: #{decoder_block_forward.1} parent=11 // pred_fallthru
          _
        // Predicated region
        $region33: #{decoder_block_forward.1} parent=11 // pred_check
          %p291 = pneg %p205
        $region34: #{decoder_block_forward.1} parent=11 // pred_check_branch
          %293 = sbr.rel (%p291) target = $region36
        $region35: #{decoder_block_forward.1} parent=11 // pred_region
          _
        $region36: #{decoder_block_forward.1} parent=11 // pred_fallthru
          _
      $region12: #{decoder_block_forward.1} parent=5 // pred_fallthru
        _
      %p294 = scmp.lt.s32.totalorder %s15, 4
      // Predicated region
      $region37: #{decoder_block_forward.1} parent=5 // pred_check
        %p295 = pneg %p294
      $region38: #{decoder_block_forward.1} parent=5 // pred_check_branch
        %297 = sbr.rel (%p295) target = $region40
      $region39: #{decoder_block_forward.1} parent=5 // pred_region
        // Predicated region
        $region41: #{decoder_block_forward.1} parent=39 // pred_check
          %p298 = pneg %p47
        $region42: #{decoder_block_forward.1} parent=39 // pred_check_branch
          %300 = sbr.rel (%p298) target = $region44
        $region43: #{decoder_block_forward.1} parent=39 // pred_region
          %p301 = scmp.lt.s32.totalorder %s22, 1
          %s302 = scalar_select %p301, %s22, 1
          %s303 = smul.addr %s302, 4
          %s304 = smul.addr %s303, 4
          %s305 = scalar_lea.vmem %s0, %s304
        $region44: #{decoder_block_forward.1} parent=39 // pred_fallthru
          _
        // Predicated region
        $region45: #{decoder_block_forward.1} parent=39 // pred_check
          %p306 = pneg %p157
        $region46: #{decoder_block_forward.1} parent=39 // pred_check_branch
          %308 = sbr.rel (%p306) target = $region48
        $region47: #{decoder_block_forward.1} parent=39 // pred_region
          %s309 = sand.u32 %s147, 1
          %s310 = sand.u32 %s147, 1
          %s311 = smul.addr %s310, 512
          %s312 = scalar_lea.vmem [#allocation3], %s311
          %s313 = smul.u32 4, %s23
          %s314 = smul.addr %s313, 4
          %s315 = scalar_lea.vmem %s5, %s314
          // Predicated region
          $region49: #{decoder_block_forward.1} parent=47 // pred_check
            _
          $region50: #{decoder_block_forward.1} parent=47 // pred_check_branch
            %317 = sbr.rel (0) target = $region52
          $region51: #{decoder_block_forward.1} parent=47 // pred_region
            // Predicated region
            $region53: #{decoder_block_forward.1} parent=51 // pred_check
              _
            $region54: #{decoder_block_forward.1} parent=51 // pred_check_branch
              %319 = sbr.rel (0) target = $region56
            $region55: #{decoder_block_forward.1} parent=51 // pred_region
              loop: start=0, step=1, limit=1
              $region57: #{decoder_block_forward.1} parent=55 // loop_pre_header
                _
              $region58: #{decoder_block_forward.1} parent=55 // loop_header
                %s321 = sphi 0, %s325
                %p322 = scmp.ge.s32.totalorder %s321, 1
                %s326 = sphi %s315, %s315
                %s327 = sphi %s312, %s312
              $region59: #{decoder_block_forward.1} parent=55 // loop_header_branch
                %324 = sbr.rel (%p322) target = $region63
              $region60: #{decoder_block_forward.1} parent=55 // loop_body
                %v328 = vld [vmem:[%s326] sm:$0xff]
                %329 = vst [vmem:[%s327] sm:$0xff] %v328
                %v330 = vld [vmem:[%s326 + $0x8] sm:$0xff]
                %331 = vst [vmem:[%s327 + $0x8] sm:$0xff] %v330
                %v332 = vld [vmem:[%s326 + $0x20] sm:$0xff]
                %333 = vst [vmem:[%s327 + $0x10] sm:$0xff] %v332
                %v334 = vld [vmem:[%s326 + $0x28] sm:$0xff]
                %335 = vst [vmem:[%s327 + $0x18] sm:$0xff] %v334
                %v336 = vld [vmem:[%s326 + $0x40] sm:$0xff]
                %337 = vst [vmem:[%s327 + $0x20] sm:$0xff] %v336
                %v338 = vld [vmem:[%s326 + $0x48] sm:$0xff]
                %339 = vst [vmem:[%s327 + $0x28] sm:$0xff] %v338
                %v340 = vld [vmem:[%s326 + $0x60] sm:$0xff]
                %341 = vst [vmem:[%s327 + $0x30] sm:$0xff] %v340
                %v342 = vld [vmem:[%s326 + $0x68] sm:$0xff]
                %343 = vst [vmem:[%s327 + $0x38] sm:$0xff] %v342
                %v344 = vld [vmem:[%s326 + $0x80] sm:$0xff]
                %345 = vst [vmem:[%s327 + $0x40] sm:$0xff] %v344
                %v346 = vld [vmem:[%s326 + $0x88] sm:$0xff]
                %347 = vst [vmem:[%s327 + $0x48] sm:$0xff] %v346
                %v348 = vld [vmem:[%s326 + $0xa0] sm:$0xff]
                %349 = vst [vmem:[%s327 + $0x50] sm:$0xff] %v348
                %v350 = vld [vmem:[%s326 + $0xa8] sm:$0xff]
                %351 = vst [vmem:[%s327 + $0x58] sm:$0xff] %v350
                %v352 = vld [vmem:[%s326 + $0xc0] sm:$0xff]
                %353 = vst [vmem:[%s327 + $0x60] sm:$0xff] %v352
                %v354 = vld [vmem:[%s326 + $0xc8] sm:$0xff]
                %355 = vst [vmem:[%s327 + $0x68] sm:$0xff] %v354
                %v356 = vld [vmem:[%s326 + $0xe0] sm:$0xff]
                %357 = vst [vmem:[%s327 + $0x70] sm:$0xff] %v356
                %v358 = vld [vmem:[%s326 + $0xe8] sm:$0xff]
                %359 = vst [vmem:[%s327 + $0x78] sm:$0xff] %v358
                %v360 = vld [vmem:[%s326 + $0x100] sm:$0xff]
                %361 = vst [vmem:[%s327 + $0x80] sm:$0xff] %v360
                %v362 = vld [vmem:[%s326 + $0x108] sm:$0xff]
                %363 = vst [vmem:[%s327 + $0x88] sm:$0xff] %v362
                %v364 = vld [vmem:[%s326 + $0x120] sm:$0xff]
                %365 = vst [vmem:[%s327 + $0x90] sm:$0xff] %v364
                %v366 = vld [vmem:[%s326 + $0x128] sm:$0xff]
                %367 = vst [vmem:[%s327 + $0x98] sm:$0xff] %v366
                %v368 = vld [vmem:[%s326 + $0x140] sm:$0xff]
                %369 = vst [vmem:[%s327 + $0xa0] sm:$0xff] %v368
                %v370 = vld [vmem:[%s326 + $0x148] sm:$0xff]
                %371 = vst [vmem:[%s327 + $0xa8] sm:$0xff] %v370
                %v372 = vld [vmem:[%s326 + $0x160] sm:$0xff]
                %373 = vst [vmem:[%s327 + $0xb0] sm:$0xff] %v372
                %v374 = vld [vmem:[%s326 + $0x168] sm:$0xff]
                %375 = vst [vmem:[%s327 + $0xb8] sm:$0xff] %v374
                %v376 = vld [vmem:[%s326 + $0x180] sm:$0xff]
                %377 = vst [vmem:[%s327 + $0xc0] sm:$0xff] %v376
                %v378 = vld [vmem:[%s326 + $0x188] sm:$0xff]
                %379 = vst [vmem:[%s327 + $0xc8] sm:$0xff] %v378
                %v380 = vld [vmem:[%s326 + $0x1a0] sm:$0xff]
                %381 = vst [vmem:[%s327 + $0xd0] sm:$0xff] %v380
                %v382 = vld [vmem:[%s326 + $0x1a8] sm:$0xff]
                %383 = vst [vmem:[%s327 + $0xd8] sm:$0xff] %v382
                %v384 = vld [vmem:[%s326 + $0x1c0] sm:$0xff]
                %385 = vst [vmem:[%s327 + $0xe0] sm:$0xff] %v384
                %v386 = vld [vmem:[%s326 + $0x1c8] sm:$0xff]
                %387 = vst [vmem:[%s327 + $0xe8] sm:$0xff] %v386
                %v388 = vld [vmem:[%s326 + $0x1e0] sm:$0xff]
                %389 = vst [vmem:[%s327 + $0xf0] sm:$0xff] %v388
                %v390 = vld [vmem:[%s326 + $0x1e8] sm:$0xff]
                %391 = vst [vmem:[%s327 + $0xf8] sm:$0xff] %v390
                %v392 = vld [vmem:[%s326 + $0x200] sm:$0xff]
                %393 = vst [vmem:[%s327 + $0x100] sm:$0xff] %v392
                %v394 = vld [vmem:[%s326 + $0x208] sm:$0xff]
                %395 = vst [vmem:[%s327 + $0x108] sm:$0xff] %v394
                %v396 = vld [vmem:[%s326 + $0x220] sm:$0xff]
                %397 = vst [vmem:[%s327 + $0x110] sm:$0xff] %v396
                %v398 = vld [vmem:[%s326 + $0x228] sm:$0xff]
                %399 = vst [vmem:[%s327 + $0x118] sm:$0xff] %v398
                %v400 = vld [vmem:[%s326 + $0x240] sm:$0xff]
                %401 = vst [vmem:[%s327 + $0x120] sm:$0xff] %v400
                %v402 = vld [vmem:[%s326 + $0x248] sm:$0xff]
                %403 = vst [vmem:[%s327 + $0x128] sm:$0xff] %v402
                %v404 = vld [vmem:[%s326 + $0x260] sm:$0xff]
                %405 = vst [vmem:[%s327 + $0x130] sm:$0xff] %v404
                %v406 = vld [vmem:[%s326 + $0x268] sm:$0xff]
                %407 = vst [vmem:[%s327 + $0x138] sm:$0xff] %v406
                %v408 = vld [vmem:[%s326 + $0x280] sm:$0xff]
                %409 = vst [vmem:[%s327 + $0x140] sm:$0xff] %v408
                %v410 = vld [vmem:[%s326 + $0x288] sm:$0xff]
                %411 = vst [vmem:[%s327 + $0x148] sm:$0xff] %v410
                %v412 = vld [vmem:[%s326 + $0x2a0] sm:$0xff]
                %413 = vst [vmem:[%s327 + $0x150] sm:$0xff] %v412
                %v414 = vld [vmem:[%s326 + $0x2a8] sm:$0xff]
                %415 = vst [vmem:[%s327 + $0x158] sm:$0xff] %v414
                %v416 = vld [vmem:[%s326 + $0x2c0] sm:$0xff]
                %417 = vst [vmem:[%s327 + $0x160] sm:$0xff] %v416
                %v418 = vld [vmem:[%s326 + $0x2c8] sm:$0xff]
                %419 = vst [vmem:[%s327 + $0x168] sm:$0xff] %v418
                %v420 = vld [vmem:[%s326 + $0x2e0] sm:$0xff]
                %421 = vst [vmem:[%s327 + $0x170] sm:$0xff] %v420
                %v422 = vld [vmem:[%s326 + $0x2e8] sm:$0xff]
                %423 = vst [vmem:[%s327 + $0x178] sm:$0xff] %v422
                %v424 = vld [vmem:[%s326 + $0x300] sm:$0xff]
                %425 = vst [vmem:[%s327 + $0x180] sm:$0xff] %v424
                %v426 = vld [vmem:[%s326 + $0x308] sm:$0xff]
                %427 = vst [vmem:[%s327 + $0x188] sm:$0xff] %v426
                %v428 = vld [vmem:[%s326 + $0x320] sm:$0xff]
                %429 = vst [vmem:[%s327 + $0x190] sm:$0xff] %v428
                %v430 = vld [vmem:[%s326 + $0x328] sm:$0xff]
                %431 = vst [vmem:[%s327 + $0x198] sm:$0xff] %v430
                %v432 = vld [vmem:[%s326 + $0x340] sm:$0xff]
                %433 = vst [vmem:[%s327 + $0x1a0] sm:$0xff] %v432
                %v434 = vld [vmem:[%s326 + $0x348] sm:$0xff]
                %435 = vst [vmem:[%s327 + $0x1a8] sm:$0xff] %v434
                %v436 = vld [vmem:[%s326 + $0x360] sm:$0xff]
                %437 = vst [vmem:[%s327 + $0x1b0] sm:$0xff] %v436
                %v438 = vld [vmem:[%s326 + $0x368] sm:$0xff]
                %439 = vst [vmem:[%s327 + $0x1b8] sm:$0xff] %v438
                %v440 = vld [vmem:[%s326 + $0x380] sm:$0xff]
                %441 = vst [vmem:[%s327 + $0x1c0] sm:$0xff] %v440
                %v442 = vld [vmem:[%s326 + $0x388] sm:$0xff]
                %443 = vst [vmem:[%s327 + $0x1c8] sm:$0xff] %v442
                %v444 = vld [vmem:[%s326 + $0x3a0] sm:$0xff]
                %445 = vst [vmem:[%s327 + $0x1d0] sm:$0xff] %v444
                %v446 = vld [vmem:[%s326 + $0x3a8] sm:$0xff]
                %447 = vst [vmem:[%s327 + $0x1d8] sm:$0xff] %v446
                %v448 = vld [vmem:[%s326 + $0x3c0] sm:$0xff]
                %449 = vst [vmem:[%s327 + $0x1e0] sm:$0xff] %v448
                %v450 = vld [vmem:[%s326 + $0x3c8] sm:$0xff]
                %451 = vst [vmem:[%s327 + $0x1e8] sm:$0xff] %v450
                %v452 = vld [vmem:[%s326 + $0x3e0] sm:$0xff]
                %453 = vst [vmem:[%s327 + $0x1f0] sm:$0xff] %v452
                %v454 = vld [vmem:[%s326 + $0x3e8] sm:$0xff]
                %455 = vst [vmem:[%s327 + $0x1f8] sm:$0xff] %v454
              $region61: #{decoder_block_forward.1} parent=55 // loop_footer
                %s325 = sadd.s32 1, %s321
              $region62: #{decoder_block_forward.1} parent=55 // loop_footer_branch
                %320 = sbr.rel target = $region58
              $region63: #{decoder_block_forward.1} parent=55 // loop_exit
                _
            $region56: #{decoder_block_forward.1} parent=51 // pred_fallthru
              _
            // Predicated region
            $region64: #{decoder_block_forward.1} parent=51 // pred_check
              _
            $region65: #{decoder_block_forward.1} parent=51 // pred_check_branch
              %457 = sbr.rel target = $region67
            $region66: #{decoder_block_forward.1} parent=51 // pred_region
              _
            $region67: #{decoder_block_forward.1} parent=51 // pred_fallthru
              _
          $region52: #{decoder_block_forward.1} parent=47 // pred_fallthru
            _
          %458 = vnop
        $region48: #{decoder_block_forward.1} parent=39 // pred_fallthru
          _
        // Predicated region
        $region68: #{decoder_block_forward.1} parent=39 // pred_check
          %p459 = pneg %p227
        $region69: #{decoder_block_forward.1} parent=39 // pred_check_branch
          %461 = sbr.rel (%p459) target = $region71
        $region70: #{decoder_block_forward.1} parent=39 // pred_region
          %s462 = smul.u32 4, %s23
          %p463 = scmp.lt.s32.totalorder %s22, 1
          %s464 = scalar_select %p463, %s22, 1
          %p465 = scmp.lt.s32.totalorder %s462, 7
          %s466 = scalar_select %p465, %s462, 7
          %s467 = smul.addr %s464, 8
          %s468 = sadd.s32 %s466, %s467
          %s469 = smul.addr %s468, 8
          %s470 = scalar_lea.vmem %s8, %s469
          %s471 = smul.u32 4, %s23
        $region71: #{decoder_block_forward.1} parent=39 // pred_fallthru
          _
      $region40: #{decoder_block_forward.1} parent=5 // pred_fallthru
        _
      %p472 = scmp.le.s32.totalorder 1, %s15
      %p473 = scmp.lt.s32.totalorder %s15, 5
      %p474 = pnand %p472, %p473
      %p475 = pneg %p474
      // Predicated region
      $region72: #{decoder_block_forward.1} parent=5 // pred_check
        _
      $region73: #{decoder_block_forward.1} parent=5 // pred_check_branch
        %477 = sbr.rel (%p474) target = $region75
      $region74: #{decoder_block_forward.1} parent=5 // pred_region
        %s478 = ssub.s32 %s15, 1
        %s479 = sand.u32 %s150, 1
        %s480 = sand.u32 %s150, 1
        %s481 = smul.addr %s480, 512
        %s482 = scalar_lea.vmem [#allocation3], %s481
        // Predicated region
        $region76: #{decoder_block_forward.1} parent=74 // pred_check
          %p483 = pneg %p163
        $region77: #{decoder_block_forward.1} parent=74 // pred_check_branch
          %485 = sbr.rel (%p483) target = $region79
        $region78: #{decoder_block_forward.1} parent=74 // pred_region
          _
        $region79: #{decoder_block_forward.1} parent=74 // pred_fallthru
          _
        %p486 = scmp.lt.s32.totalorder %s24, 1
        %s487 = scalar_select %p486, %s24, 1
        %s488 = smul.addr %s487, 4
        %s489 = smul.addr %s488, 4
        %s490 = scalar_lea.vmem %s0, %s489
        %p491 = pneg %p53
        %p492 = pneg %p50
        %p493 = pneg %p74
        %p494 = pneg %p71
        %p495 = pneg %p95
        %p496 = pneg %p92
        %p497 = pneg %p116
        %p498 = pneg %p113
        %p499 = pneg %p137
        %p500 = pneg %p134
        %s501 = sand.u32 %s150, 1
        %s502 = sand.u32 %s150, 1
        %s503 = smul.addr %s502, 512
        %s504 = scalar_lea.vmem [#allocation3], %s503
        %p505 = pneg %p163
        %p506 = pneg %p160
        %p507 = pneg %p184
        %p508 = pneg %p181
        %p509 = pneg %p205
        %p510 = pneg %p202
        %s511 = smul.u32 4, %s25
        %p512 = scmp.lt.s32.totalorder %s24, 1
        %s513 = scalar_select %p512, %s24, 1
        %p514 = scmp.lt.s32.totalorder %s511, 7
        %s515 = scalar_select %p514, %s511, 7
        %s516 = smul.addr %s513, 8
        %s517 = sadd.s32 %s515, %s516
        %s518 = smul.addr %s517, 8
        %s519 = scalar_lea.vmem %s8, %s518
        %p520 = pneg %p233
        %p521 = pneg %p230
        %p522 = pneg %p261
        %p523 = pneg %p258
        %s524 = sand.u32 %s248, 1
        %s525 = sand.u32 %s248, 1
        %s526 = smul.addr %s525, 64
        %s527 = scalar_lea.vmem [#allocation4], %s526
        %p528 = scmp.lt.s32.totalorder %s24, 1
        %s529 = scalar_select %p528, %s24, 1
        %s530 = smul.addr %s529, 4
        %s531 = smul.addr %s530, 4
        %s532 = scalar_lea.vmem %s0, %s531
        %s533 = smul.u32 4, %s25
        %s534 = smul.u32 4, %s25
        %p535 = scmp.lt.s32.totalorder %s24, 1
        %s536 = scalar_select %p535, %s24, 1
        %p537 = scmp.lt.s32.totalorder %s534, 7
        %s538 = scalar_select %p537, %s534, 7
        %s539 = smul.addr %s536, 8
        %s540 = sadd.s32 %s538, %s539
        %s541 = smul.addr %s540, 8
        %s542 = scalar_lea.vmem %s8, %s541
        %s543 = smul.u32 4, %s25
        %s544 = smul.u32 4, %s25
        %p546 = scmp.eq.s32.totalorder %s25, 0
        // Predicated region
        $region80: #{decoder_block_forward.1} parent=74 // pred_check
          %p547 = pneg %p546
        $region81: #{decoder_block_forward.1} parent=74 // pred_check_branch
          %549 = sbr.rel (%p547) target = $region83
        $region82: #{decoder_block_forward.1} parent=74 // pred_region
          %v550 = vld [vmem:[%s532] sm:$0xff]
          %v551 = vld [vmem:[%s532 + $0x8] sm:$0xff]
          %v552 = vld [vmem:[%s1] sm:$0x3]
          %v553 = vld [vmem:[%s2] sm:$0xf]
          %555 = vset.pattern.permute.xlu0 0
          %556 = vperm.xlu0 %555, %v553
          %v557 = vpop.permute.xlu0 %556
          %v561 = vunpack.c.l.b16 %v550
          %v562 = vunpack.c.h.b16 %v550
          %v563 = vunpack.c.l.b16 %v551
          %v564 = vunpack.c.h.b16 %v551
          %v565 = vpack.c.b16 %v563, %v561
          %v566 = vpack.c.b16 %v564, %v562
          %vm569 = vcmask 130048
          %v571 = vsel %vm569, %v552, 0
          %573 = vmatpush.bf16.msra.mxu0 0
          %574 = vmatpush.bf16.msra.mxu0 0
          %575 = vmatpush.bf16.msra.mxu0 0
          %576 = vmatpush.bf16.msra.mxu0 0
          %577 = vmatpush.bf16.msra.mxu0 0
          %578 = vmatpush.bf16.msra.mxu0 0
          %579 = vmatpush.bf16.msra.mxu0 0
          %580 = vmatpush.bf16.msra.mxu0 %v565
          %581 = vmatmul.bf16.gmra.mxu0 %v571
          %v582 = vpop.f32.mrf.mxu0
          %v583 = vadd.f32 %v557, %v582
          %v584 = vpop.f32.mrf.mxu0
          %585 = vdwg.mxu0
          %586 = vmatpush.bf16.msra.mxu0 0
          %587 = vmatpush.bf16.msra.mxu0 0
          %588 = vmatpush.bf16.msra.mxu0 0
          %589 = vmatpush.bf16.msra.mxu0 0
          %590 = vmatpush.bf16.msra.mxu0 0
          %591 = vmatpush.bf16.msra.mxu0 0
          %592 = vmatpush.bf16.msra.mxu0 0
          %593 = vmatpush.bf16.msra.mxu0 %v566
          %594 = vmatmul.bf16.gmra.mxu0 %v571
          %v595 = vpop.f32.mrf.mxu0
          %v596 = vadd.f32 %v557, %v595
          %v597 = vpop.f32.mrf.mxu0
          %598 = vdwg.mxu0
          %v599 = vmax.f32 %v583, 0.0
          %v600 = vmax.f32 %v596, 0.0
          %v601 = vld [vmem:[%s3] sm:$0xf]
          %603 = vset.pattern.permute.xlu0 0
          %604 = vperm.xlu0 %603, %v601
          %v605 = vpop.permute.xlu0 %604
          %v607 = vmul.f32 %v599, %v605
          %v608 = vmul.f32 %v600, %v605
          %v609 = vld [vmem:[%s4] sm:$0xf]
          %611 = vset.pattern.permute.xlu0 0
          %612 = vperm.xlu0 %611, %v609
          %v613 = vpop.permute.xlu0 %612
          %v615 = vadd.f32 %v607, %v613
          %v616 = vadd.f32 %v608, %v613
          %v617 = vpack.c.bf16 %v616, %v615
          %v619 = vrot.slane %v617, 2
          %vm620 = vcmask 1041408
          %v623 = vsel %vm620, %v617, %v619
          %625 = vst [vmem:[#allocation2] sm:$0xf] %v623
        $region83: #{decoder_block_forward.1} parent=74 // pred_fallthru
          _
        %v626 = vld [vmem:[#allocation2] sm:$0xf]
        %v627 = vld [vmem:[%s482] sm:$0xff]
        %v628 = vld [vmem:[%s482 + $0x8] sm:$0xff]
        %v629 = vld [vmem:[%s482 + $0x10] sm:$0xff]
        %v630 = vld [vmem:[%s482 + $0x18] sm:$0xff]
        %v631 = vld [vmem:[%s482 + $0x20] sm:$0xff]
        %v632 = vld [vmem:[%s482 + $0x28] sm:$0xff]
        %v633 = vld [vmem:[%s482 + $0x30] sm:$0xff]
        %v634 = vld [vmem:[%s482 + $0x38] sm:$0xff]
        %v635 = vld [vmem:[%s482 + $0x40] sm:$0xff]
        %v636 = vld [vmem:[%s482 + $0x48] sm:$0xff]
        %v637 = vld [vmem:[%s482 + $0x50] sm:$0xff]
        %v638 = vld [vmem:[%s482 + $0x58] sm:$0xff]
        %v639 = vld [vmem:[%s482 + $0x60] sm:$0xff]
        %v640 = vld [vmem:[%s482 + $0x68] sm:$0xff]
        %v641 = vld [vmem:[%s482 + $0x70] sm:$0xff]
        %v642 = vld [vmem:[%s482 + $0x78] sm:$0xff]
        %v643 = vld [vmem:[%s482 + $0x80] sm:$0xff]
        %v644 = vld [vmem:[%s482 + $0x88] sm:$0xff]
        %v645 = vld [vmem:[%s482 + $0x90] sm:$0xff]
        %v646 = vld [vmem:[%s482 + $0x98] sm:$0xff]
        %v647 = vld [vmem:[%s482 + $0xa0] sm:$0xff]
        %v648 = vld [vmem:[%s482 + $0xa8] sm:$0xff]
        %v649 = vld [vmem:[%s482 + $0xb0] sm:$0xff]
        %v650 = vld [vmem:[%s482 + $0xb8] sm:$0xff]
        %v651 = vld [vmem:[%s482 + $0xc0] sm:$0xff]
        %v652 = vld [vmem:[%s482 + $0xc8] sm:$0xff]
        %v653 = vld [vmem:[%s482 + $0xd0] sm:$0xff]
        %v654 = vld [vmem:[%s482 + $0xd8] sm:$0xff]
        %v655 = vld [vmem:[%s482 + $0xe0] sm:$0xff]
        %v656 = vld [vmem:[%s482 + $0xe8] sm:$0xff]
        %v657 = vld [vmem:[%s482 + $0xf0] sm:$0xff]
        %v658 = vld [vmem:[%s482 + $0xf8] sm:$0xff]
        %v659 = vld [vmem:[%s482 + $0x100] sm:$0xff]
        %v660 = vld [vmem:[%s482 + $0x108] sm:$0xff]
        %v661 = vld [vmem:[%s482 + $0x110] sm:$0xff]
        %v662 = vld [vmem:[%s482 + $0x118] sm:$0xff]
        %v663 = vld [vmem:[%s482 + $0x120] sm:$0xff]
        %v664 = vld [vmem:[%s482 + $0x128] sm:$0xff]
        %v665 = vld [vmem:[%s482 + $0x130] sm:$0xff]
        %v666 = vld [vmem:[%s482 + $0x138] sm:$0xff]
        %v667 = vld [vmem:[%s482 + $0x140] sm:$0xff]
        %v668 = vld [vmem:[%s482 + $0x148] sm:$0xff]
        %v669 = vld [vmem:[%s482 + $0x150] sm:$0xff]
        %v670 = vld [vmem:[%s482 + $0x158] sm:$0xff]
        %v671 = vld [vmem:[%s482 + $0x160] sm:$0xff]
        %v672 = vld [vmem:[%s482 + $0x168] sm:$0xff]
        %v673 = vld [vmem:[%s482 + $0x170] sm:$0xff]
        %v674 = vld [vmem:[%s482 + $0x178] sm:$0xff]
        %v675 = vld [vmem:[%s482 + $0x180] sm:$0xff]
        %v676 = vld [vmem:[%s482 + $0x188] sm:$0xff]
        %v677 = vld [vmem:[%s482 + $0x190] sm:$0xff]
        %v678 = vld [vmem:[%s482 + $0x198] sm:$0xff]
        %v679 = vld [vmem:[%s482 + $0x1a0] sm:$0xff]
        %v680 = vld [vmem:[%s482 + $0x1a8] sm:$0xff]
        %v681 = vld [vmem:[%s482 + $0x1b0] sm:$0xff]
        %v682 = vld [vmem:[%s482 + $0x1b8] sm:$0xff]
        %v683 = vld [vmem:[%s482 + $0x1c0] sm:$0xff]
        %v684 = vld [vmem:[%s482 + $0x1c8] sm:$0xff]
        %v685 = vld [vmem:[%s482 + $0x1d0] sm:$0xff]
        %v686 = vld [vmem:[%s482 + $0x1d8] sm:$0xff]
        %v687 = vld [vmem:[%s482 + $0x1e0] sm:$0xff]
        %v688 = vld [vmem:[%s482 + $0x1e8] sm:$0xff]
        %v689 = vld [vmem:[%s482 + $0x1f0] sm:$0xff]
        %v690 = vld [vmem:[%s482 + $0x1f8] sm:$0xff]
        %692 = vst [vmem:[#allocation1] ss:$4 sm:$0xff] %v626
        %v693 = vld.sshfl [vmem:[#allocation1] sm:$0xff pattern:$0x73625140]
        %v694 = vld.sshfl [vmem:[#allocation1 + $0x8] sm:$0xff pattern:$0x73625140]
        %v761 = vunpack.c.l.b16 %v627
        %v762 = vunpack.c.h.b16 %v627
        %v763 = vunpack.c.l.b16 %v628
        %v764 = vunpack.c.h.b16 %v628
        %v765 = vunpack.c.l.b16 %v629
        %v766 = vunpack.c.h.b16 %v629
        %v767 = vunpack.c.l.b16 %v630
        %v768 = vunpack.c.h.b16 %v630
        %v769 = vunpack.c.l.b16 %v631
        %v770 = vunpack.c.h.b16 %v631
        %v771 = vunpack.c.l.b16 %v632
        %v772 = vunpack.c.h.b16 %v632
        %v773 = vunpack.c.l.b16 %v633
        %v774 = vunpack.c.h.b16 %v633
        %v775 = vunpack.c.l.b16 %v634
        %v776 = vunpack.c.h.b16 %v634
        %v777 = vunpack.c.l.b16 %v635
        %v778 = vunpack.c.h.b16 %v635
        %v779 = vunpack.c.l.b16 %v636
        %v780 = vunpack.c.h.b16 %v636
        %v781 = vunpack.c.l.b16 %v637
        %v782 = vunpack.c.h.b16 %v637
        %v783 = vunpack.c.l.b16 %v638
        %v784 = vunpack.c.h.b16 %v638
        %v785 = vunpack.c.l.b16 %v639
        %v786 = vunpack.c.h.b16 %v639
        %v787 = vunpack.c.l.b16 %v640
        %v788 = vunpack.c.h.b16 %v640
        %v789 = vunpack.c.l.b16 %v641
        %v790 = vunpack.c.h.b16 %v641
        %v791 = vunpack.c.l.b16 %v642
        %v792 = vunpack.c.h.b16 %v642
        %v793 = vunpack.c.l.b16 %v643
        %v794 = vunpack.c.h.b16 %v643
        %v795 = vunpack.c.l.b16 %v644
        %v796 = vunpack.c.h.b16 %v644
        %v797 = vunpack.c.l.b16 %v645
        %v798 = vunpack.c.h.b16 %v645
        %v799 = vunpack.c.l.b16 %v646
        %v800 = vunpack.c.h.b16 %v646
        %v801 = vunpack.c.l.b16 %v647
        %v802 = vunpack.c.h.b16 %v647
        %v803 = vunpack.c.l.b16 %v648
        %v804 = vunpack.c.h.b16 %v648
        %v805 = vunpack.c.l.b16 %v649
        %v806 = vunpack.c.h.b16 %v649
        %v807 = vunpack.c.l.b16 %v650
        %v808 = vunpack.c.h.b16 %v650
        %v809 = vunpack.c.l.b16 %v651
        %v810 = vunpack.c.h.b16 %v651
        %v811 = vunpack.c.l.b16 %v652
        %v812 = vunpack.c.h.b16 %v652
        %v813 = vunpack.c.l.b16 %v653
        %v814 = vunpack.c.h.b16 %v653
        %v815 = vunpack.c.l.b16 %v654
        %v816 = vunpack.c.h.b16 %v654
        %v817 = vunpack.c.l.b16 %v655
        %v818 = vunpack.c.h.b16 %v655
        %v819 = vunpack.c.l.b16 %v656
        %v820 = vunpack.c.h.b16 %v656
        %v821 = vunpack.c.l.b16 %v657
        %v822 = vunpack.c.h.b16 %v657
        %v823 = vunpack.c.l.b16 %v658
        %v824 = vunpack.c.h.b16 %v658
        %v825 = vunpack.c.l.b16 %v659
        %v826 = vunpack.c.h.b16 %v659
        %v827 = vunpack.c.l.b16 %v660
        %v828 = vunpack.c.h.b16 %v660
        %v829 = vunpack.c.l.b16 %v661
        %v830 = vunpack.c.h.b16 %v661
        %v831 = vunpack.c.l.b16 %v662
        %v832 = vunpack.c.h.b16 %v662
        %v833 = vunpack.c.l.b16 %v663
        %v834 = vunpack.c.h.b16 %v663
        %v835 = vunpack.c.l.b16 %v664
        %v836 = vunpack.c.h.b16 %v664
        %v837 = vunpack.c.l.b16 %v665
        %v838 = vunpack.c.h.b16 %v665
        %v839 = vunpack.c.l.b16 %v666
        %v840 = vunpack.c.h.b16 %v666
        %v841 = vunpack.c.l.b16 %v667
        %v842 = vunpack.c.h.b16 %v667
        %v843 = vunpack.c.l.b16 %v668
        %v844 = vunpack.c.h.b16 %v668
        %v845 = vunpack.c.l.b16 %v669
        %v846 = vunpack.c.h.b16 %v669
        %v847 = vunpack.c.l.b16 %v670
        %v848 = vunpack.c.h.b16 %v670
        %v849 = vunpack.c.l.b16 %v671
        %v850 = vunpack.c.h.b16 %v671
        %v851 = vunpack.c.l.b16 %v672
        %v852 = vunpack.c.h.b16 %v672
        %v853 = vunpack.c.l.b16 %v673
        %v854 = vunpack.c.h.b16 %v673
        %v855 = vunpack.c.l.b16 %v674
        %v856 = vunpack.c.h.b16 %v674
        %v857 = vunpack.c.l.b16 %v675
        %v858 = vunpack.c.h.b16 %v675
        %v859 = vunpack.c.l.b16 %v676
        %v860 = vunpack.c.h.b16 %v676
        %v861 = vunpack.c.l.b16 %v677
        %v862 = vunpack.c.h.b16 %v677
        %v863 = vunpack.c.l.b16 %v678
        %v864 = vunpack.c.h.b16 %v678
        %v865 = vunpack.c.l.b16 %v679
        %v866 = vunpack.c.h.b16 %v679
        %v867 = vunpack.c.l.b16 %v680
        %v868 = vunpack.c.h.b16 %v680
        %v869 = vunpack.c.l.b16 %v681
        %v870 = vunpack.c.h.b16 %v681
        %v871 = vunpack.c.l.b16 %v682
        %v872 = vunpack.c.h.b16 %v682
        %v873 = vunpack.c.l.b16 %v683
        %v874 = vunpack.c.h.b16 %v683
        %v875 = vunpack.c.l.b16 %v684
        %v876 = vunpack.c.h.b16 %v684
        %v877 = vunpack.c.l.b16 %v685
        %v878 = vunpack.c.h.b16 %v685
        %v879 = vunpack.c.l.b16 %v686
        %v880 = vunpack.c.h.b16 %v686
        %v881 = vunpack.c.l.b16 %v687
        %v882 = vunpack.c.h.b16 %v687
        %v883 = vunpack.c.l.b16 %v688
        %v884 = vunpack.c.h.b16 %v688
        %v885 = vunpack.c.l.b16 %v689
        %v886 = vunpack.c.h.b16 %v689
        %v887 = vunpack.c.l.b16 %v690
        %v888 = vunpack.c.h.b16 %v690
        %v889 = vpack.c.b16 %v765, %v761
        %v890 = vpack.c.b16 %v766, %v762
        %v891 = vpack.c.b16 %v767, %v763
        %v892 = vpack.c.b16 %v768, %v764
        %v893 = vpack.c.b16 %v773, %v769
        %v894 = vpack.c.b16 %v774, %v770
        %v895 = vpack.c.b16 %v775, %v771
        %v896 = vpack.c.b16 %v776, %v772
        %v897 = vpack.c.b16 %v781, %v777
        %v898 = vpack.c.b16 %v782, %v778
        %v899 = vpack.c.b16 %v783, %v779
        %v900 = vpack.c.b16 %v784, %v780
        %v901 = vpack.c.b16 %v789, %v785
        %v902 = vpack.c.b16 %v790, %v786
        %v903 = vpack.c.b16 %v791, %v787
        %v904 = vpack.c.b16 %v792, %v788
        %v905 = vpack.c.b16 %v797, %v793
        %v906 = vpack.c.b16 %v798, %v794
        %v907 = vpack.c.b16 %v799, %v795
        %v908 = vpack.c.b16 %v800, %v796
        %v909 = vpack.c.b16 %v805, %v801
        %v910 = vpack.c.b16 %v806, %v802
        %v911 = vpack.c.b16 %v807, %v803
        %v912 = vpack.c.b16 %v808, %v804
        %v913 = vpack.c.b16 %v813, %v809
        %v914 = vpack.c.b16 %v814, %v810
        %v915 = vpack.c.b16 %v815, %v811
        %v916 = vpack.c.b16 %v816, %v812
        %v917 = vpack.c.b16 %v821, %v817
        %v918 = vpack.c.b16 %v822, %v818
        %v919 = vpack.c.b16 %v823, %v819
        %v920 = vpack.c.b16 %v824, %v820
        %v921 = vpack.c.b16 %v829, %v825
        %v922 = vpack.c.b16 %v830, %v826
        %v923 = vpack.c.b16 %v831, %v827
        %v924 = vpack.c.b16 %v832, %v828
        %v925 = vpack.c.b16 %v837, %v833
        %v926 = vpack.c.b16 %v838, %v834
        %v927 = vpack.c.b16 %v839, %v835
        %v928 = vpack.c.b16 %v840, %v836
        %v929 = vpack.c.b16 %v845, %v841
        %v930 = vpack.c.b16 %v846, %v842
        %v931 = vpack.c.b16 %v847, %v843
        %v932 = vpack.c.b16 %v848, %v844
        %v933 = vpack.c.b16 %v853, %v849
        %v934 = vpack.c.b16 %v854, %v850
        %v935 = vpack.c.b16 %v855, %v851
        %v936 = vpack.c.b16 %v856, %v852
        %v937 = vpack.c.b16 %v861, %v857
        %v938 = vpack.c.b16 %v862, %v858
        %v939 = vpack.c.b16 %v863, %v859
        %v940 = vpack.c.b16 %v864, %v860
        %v941 = vpack.c.b16 %v869, %v865
        %v942 = vpack.c.b16 %v870, %v866
        %v943 = vpack.c.b16 %v871, %v867
        %v944 = vpack.c.b16 %v872, %v868
        %v945 = vpack.c.b16 %v877, %v873
        %v946 = vpack.c.b16 %v878, %v874
        %v947 = vpack.c.b16 %v879, %v875
        %v948 = vpack.c.b16 %v880, %v876
        %v949 = vpack.c.b16 %v885, %v881
        %v950 = vpack.c.b16 %v886, %v882
        %v951 = vpack.c.b16 %v887, %v883
        %v952 = vpack.c.b16 %v888, %v884
        %1017 = vmatpush.bf16.msra.mxu0 %v917
        %1018 = vmatpush.bf16.msra.mxu0 %v913
        %1019 = vmatpush.bf16.msra.mxu0 %v909
        %1020 = vmatpush.bf16.msra.mxu0 %v905
        %1021 = vmatpush.bf16.msra.mxu0 %v901
        %1022 = vmatpush.bf16.msra.mxu0 %v897
        %1023 = vmatpush.bf16.msra.mxu0 %v893
        %1024 = vmatpush.bf16.msra.mxu0 %v889
        %1025 = vmatmul.bf16.gmra.mxu0 %v693
        %v1026 = vpop.f32.mrf.mxu0
        %v1027 = vadd.f32 0.0, %v1026
        %v1028 = vpop.f32.mrf.mxu0
        %1029 = vdwg.mxu0
        %1030 = vmatpush.bf16.msra.mxu0 %v949
        %1031 = vmatpush.bf16.msra.mxu0 %v945
        %1032 = vmatpush.bf16.msra.mxu0 %v941
        %1033 = vmatpush.bf16.msra.mxu0 %v937
        %1034 = vmatpush.bf16.msra.mxu0 %v933
        %1035 = vmatpush.bf16.msra.mxu0 %v929
        %1036 = vmatpush.bf16.msra.mxu0 %v925
        %1037 = vmatpush.bf16.msra.mxu0 %v921
        %1038 = vmatmul.bf16.gmra.mxu0 %v694
        %v1039 = vpop.f32.mrf.mxu0
        %v1040 = vadd.f32 %v1027, %v1039
        %v1041 = vpop.f32.mrf.mxu0
        %1042 = vdwg.mxu0
        %1043 = vmatpush.bf16.msra.mxu0 %v918
        %1044 = vmatpush.bf16.msra.mxu0 %v914
        %1045 = vmatpush.bf16.msra.mxu0 %v910
        %1046 = vmatpush.bf16.msra.mxu0 %v906
        %1047 = vmatpush.bf16.msra.mxu0 %v902
        %1048 = vmatpush.bf16.msra.mxu0 %v898
        %1049 = vmatpush.bf16.msra.mxu0 %v894
        %1050 = vmatpush.bf16.msra.mxu0 %v890
        %1051 = vmatmul.bf16.gmra.mxu0 %v693
        %v1052 = vpop.f32.mrf.mxu0
        %v1053 = vadd.f32 0.0, %v1052
        %v1054 = vpop.f32.mrf.mxu0
        %1055 = vdwg.mxu0
        %1056 = vmatpush.bf16.msra.mxu0 %v950
        %1057 = vmatpush.bf16.msra.mxu0 %v946
        %1058 = vmatpush.bf16.msra.mxu0 %v942
        %1059 = vmatpush.bf16.msra.mxu0 %v938
        %1060 = vmatpush.bf16.msra.mxu0 %v934
        %1061 = vmatpush.bf16.msra.mxu0 %v930
        %1062 = vmatpush.bf16.msra.mxu0 %v926
        %1063 = vmatpush.bf16.msra.mxu0 %v922
        %1064 = vmatmul.bf16.gmra.mxu0 %v694
        %v1065 = vpop.f32.mrf.mxu0
        %v1066 = vadd.f32 %v1053, %v1065
        %v1067 = vpop.f32.mrf.mxu0
        %1068 = vdwg.mxu0
        %1069 = vmatpush.bf16.msra.mxu0 %v919
        %1070 = vmatpush.bf16.msra.mxu0 %v915
        %1071 = vmatpush.bf16.msra.mxu0 %v911
        %1072 = vmatpush.bf16.msra.mxu0 %v907
        %1073 = vmatpush.bf16.msra.mxu0 %v903
        %1074 = vmatpush.bf16.msra.mxu0 %v899
        %1075 = vmatpush.bf16.msra.mxu0 %v895
        %1076 = vmatpush.bf16.msra.mxu0 %v891
        %1077 = vmatmul.bf16.gmra.mxu0 %v693
        %v1078 = vpop.f32.mrf.mxu0
        %v1079 = vadd.f32 0.0, %v1078
        %v1080 = vpop.f32.mrf.mxu0
        %1081 = vdwg.mxu0
        %1082 = vmatpush.bf16.msra.mxu0 %v951
        %1083 = vmatpush.bf16.msra.mxu0 %v947
        %1084 = vmatpush.bf16.msra.mxu0 %v943
        %1085 = vmatpush.bf16.msra.mxu0 %v939
        %1086 = vmatpush.bf16.msra.mxu0 %v935
        %1087 = vmatpush.bf16.msra.mxu0 %v931
        %1088 = vmatpush.bf16.msra.mxu0 %v927
        %1089 = vmatpush.bf16.msra.mxu0 %v923
        %1090 = vmatmul.bf16.gmra.mxu0 %v694
        %v1091 = vpop.f32.mrf.mxu0
        %v1092 = vadd.f32 %v1079, %v1091
        %v1093 = vpop.f32.mrf.mxu0
        %1094 = vdwg.mxu0
        %1095 = vmatpush.bf16.msra.mxu0 %v920
        %1096 = vmatpush.bf16.msra.mxu0 %v916
        %1097 = vmatpush.bf16.msra.mxu0 %v912
        %1098 = vmatpush.bf16.msra.mxu0 %v908
        %1099 = vmatpush.bf16.msra.mxu0 %v904
        %1100 = vmatpush.bf16.msra.mxu0 %v900
        %1101 = vmatpush.bf16.msra.mxu0 %v896
        %1102 = vmatpush.bf16.msra.mxu0 %v892
        %1103 = vmatmul.bf16.gmra.mxu0 %v693
        %v1104 = vpop.f32.mrf.mxu0
        %v1105 = vadd.f32 0.0, %v1104
        %v1106 = vpop.f32.mrf.mxu0
        %1107 = vdwg.mxu0
        %1108 = vmatpush.bf16.msra.mxu0 %v952
        %1109 = vmatpush.bf16.msra.mxu0 %v948
        %1110 = vmatpush.bf16.msra.mxu0 %v944
        %1111 = vmatpush.bf16.msra.mxu0 %v940
        %1112 = vmatpush.bf16.msra.mxu0 %v936
        %1113 = vmatpush.bf16.msra.mxu0 %v932
        %1114 = vmatpush.bf16.msra.mxu0 %v928
        %1115 = vmatpush.bf16.msra.mxu0 %v924
        %1116 = vmatmul.bf16.gmra.mxu0 %v694
        %v1117 = vpop.f32.mrf.mxu0
        %v1118 = vadd.f32 %v1105, %v1117
        %v1119 = vpop.f32.mrf.mxu0
        %1120 = vdwg.mxu0
        %v1121 = vmax.f32 %v1040, 0.0
        %v1122 = vmax.f32 %v1066, 0.0
        %v1123 = vmax.f32 %v1092, 0.0
        %v1124 = vmax.f32 %v1118, 0.0
        %v1125 = vld [vmem:[%s6] sm:$0xf]
        %v1126 = vpack.c.bf16 %v1121, %v1121
        %v1127 = vpack.c.bf16 %v1122, %v1122
        %v1128 = vpack.c.bf16 %v1123, %v1123
        %v1129 = vpack.c.bf16 %v1124, %v1124
        %v1130 = vld [vmem:[%s7] sm:$0xff]
        %1132 = vset.pattern.permute.xlu0 0
        %1133 = vperm.xlu0 %1132, %v1130
        %v1134 = vpop.permute.xlu0 %1133
        %vm1136 = vcmask 31744
        %v1138 = vsel %vm1136, %v1125, 0
        %vm1140 = vcmask 1041408
        %v1142 = vsel %vm1140, %v1126, 0
        %v1145 = vsel %vm1140, %v1127, 0
        %v1148 = vsel %vm1140, %v1128, 0
        %v1151 = vsel %vm1140, %v1129, 0
        %1153 = vmatpush.bf16.msra.mxu0 0
        %1154 = vmatpush.bf16.msra.mxu0 0
        %1155 = vmatpush.bf16.msra.mxu0 0
        %1156 = vmatpush.bf16.msra.mxu0 0
        %1157 = vmatpush.bf16.msra.mxu0 0
        %1158 = vmatpush.bf16.msra.mxu0 0
        %1159 = vmatpush.bf16.msra.mxu0 0
        %1160 = vmatpush.bf16.msra.mxu0 %v1142
        %1161 = vmatmul.bf16.gmra.mxu0 %v1138
        %v1162 = vpop.f32.mrf.mxu0
        %v1163 = vadd.f32 %v1134, %v1162
        %v1164 = vpop.f32.mrf.mxu0
        %1165 = vdwg.mxu0
        %1166 = vmatpush.bf16.msra.mxu0 0
        %1167 = vmatpush.bf16.msra.mxu0 0
        %1168 = vmatpush.bf16.msra.mxu0 0
        %1169 = vmatpush.bf16.msra.mxu0 0
        %1170 = vmatpush.bf16.msra.mxu0 0
        %1171 = vmatpush.bf16.msra.mxu0 0
        %1172 = vmatpush.bf16.msra.mxu0 0
        %1173 = vmatpush.bf16.msra.mxu0 %v1145
        %1174 = vmatmul.bf16.gmra.mxu0 %v1138
        %v1175 = vpop.f32.mrf.mxu0
        %v1176 = vadd.f32 %v1134, %v1175
        %v1177 = vpop.f32.mrf.mxu0
        %1178 = vdwg.mxu0
        %1179 = vmatpush.bf16.msra.mxu0 0
        %1180 = vmatpush.bf16.msra.mxu0 0
        %1181 = vmatpush.bf16.msra.mxu0 0
        %1182 = vmatpush.bf16.msra.mxu0 0
        %1183 = vmatpush.bf16.msra.mxu0 0
        %1184 = vmatpush.bf16.msra.mxu0 0
        %1185 = vmatpush.bf16.msra.mxu0 0
        %1186 = vmatpush.bf16.msra.mxu0 %v1148
        %1187 = vmatmul.bf16.gmra.mxu0 %v1138
        %v1188 = vpop.f32.mrf.mxu0
        %v1189 = vadd.f32 %v1134, %v1188
        %v1190 = vpop.f32.mrf.mxu0
        %1191 = vdwg.mxu0
        %1192 = vmatpush.bf16.msra.mxu0 0
        %1193 = vmatpush.bf16.msra.mxu0 0
        %1194 = vmatpush.bf16.msra.mxu0 0
        %1195 = vmatpush.bf16.msra.mxu0 0
        %1196 = vmatpush.bf16.msra.mxu0 0
        %1197 = vmatpush.bf16.msra.mxu0 0
        %1198 = vmatpush.bf16.msra.mxu0 0
        %1199 = vmatpush.bf16.msra.mxu0 %v1151
        %1200 = vmatmul.bf16.gmra.mxu0 %v1138
        %v1201 = vpop.f32.mrf.mxu0
        %v1202 = vadd.f32 %v1134, %v1201
        %v1203 = vpop.f32.mrf.mxu0
        %1204 = vdwg.mxu0
        %v1205 = vmax.f32 %v1163, 0.0
        %v1206 = vmax.f32 %v1176, 0.0
        %v1207 = vmax.f32 %v1189, 0.0
        %v1208 = vmax.f32 %v1202, 0.0
        %1209 = vst [vmem:[%s527] sm:$0xff] %v1205
        %1210 = vst [vmem:[%s527 + $0x8] sm:$0xff] %v1206
        %1211 = vst [vmem:[%s527 + $0x10] sm:$0xff] %v1207
        %1212 = vst [vmem:[%s527 + $0x18] sm:$0xff] %v1208
        %v1213 = vld [vmem:[%s542] sm:$0xff]
        %v1214 = vld [vmem:[%s542 + $0x8] sm:$0xff]
        %v1215 = vld [vmem:[%s542 + $0x10] sm:$0xff]
        %v1216 = vld [vmem:[%s542 + $0x18] sm:$0xff]
        %1217 = vst [vmem:[%s527 + $0x20] sm:$0xff] %v1213
        %1218 = vst [vmem:[%s527 + $0x28] sm:$0xff] %v1214
        %1219 = vst [vmem:[%s527 + $0x30] sm:$0xff] %v1215
        %1220 = vst [vmem:[%s527 + $0x38] sm:$0xff] %v1216
        %s1221 = sand.u32 %s248, 1
        %s1222 = sand.u32 %s248, 1
        %s1223 = smul.addr %s1222, 64
        %s1224 = scalar_lea.vmem [#allocation4], %s1223
        // Predicated region
        $region84: #{decoder_block_forward.1} parent=74 // pred_check
          %p1225 = pneg %p258
        $region85: #{decoder_block_forward.1} parent=74 // pred_check_branch
          %1227 = sbr.rel (%p1225) target = $region87
        $region86: #{decoder_block_forward.1} parent=74 // pred_region
          %s1228 = smul.u32 4, %s25
          %s1229 = smul.addr %s24, 16
          %s1230 = sadd.s32 %s1228, %s1229
          %s1231 = smul.addr %s1230, 8
          %s1232 = scalar_lea.vmem %s9, %s1231
          // Predicated region
          $region88: #{decoder_block_forward.1} parent=86 // pred_check
            _
          $region89: #{decoder_block_forward.1} parent=86 // pred_check_branch
            %1234 = sbr.rel (0) target = $region91
          $region90: #{decoder_block_forward.1} parent=86 // pred_region
            // Predicated region
            $region92: #{decoder_block_forward.1} parent=90 // pred_check
              _
            $region93: #{decoder_block_forward.1} parent=90 // pred_check_branch
              %1236 = sbr.rel (0) target = $region95
            $region94: #{decoder_block_forward.1} parent=90 // pred_region
              loop: start=0, step=1, limit=1
              $region96: #{decoder_block_forward.1} parent=94 // loop_pre_header
                _
              $region97: #{decoder_block_forward.1} parent=94 // loop_header
                %s1238 = sphi 0, %s1242
                %p1239 = scmp.ge.s32.totalorder %s1238, 1
                %s1243 = sphi %s1224, %s1224
                %s1244 = sphi %s1232, %s1232
              $region98: #{decoder_block_forward.1} parent=94 // loop_header_branch
                %1241 = sbr.rel (%p1239) target = $region102
              $region99: #{decoder_block_forward.1} parent=94 // loop_body
                %v1245 = vld [vmem:[%s1243] sm:$0xff]
                %1246 = vst [vmem:[%s1244] sm:$0xff] %v1245
                %v1247 = vld [vmem:[%s1243 + $0x8] sm:$0xff]
                %1248 = vst [vmem:[%s1244 + $0x8] sm:$0xff] %v1247
                %v1249 = vld [vmem:[%s1243 + $0x10] sm:$0xff]
                %1250 = vst [vmem:[%s1244 + $0x10] sm:$0xff] %v1249
                %v1251 = vld [vmem:[%s1243 + $0x18] sm:$0xff]
                %1252 = vst [vmem:[%s1244 + $0x18] sm:$0xff] %v1251
                %v1253 = vld [vmem:[%s1243 + $0x20] sm:$0xff]
                %1254 = vst [vmem:[%s1244 + $0x40] sm:$0xff] %v1253
                %v1255 = vld [vmem:[%s1243 + $0x28] sm:$0xff]
                %1256 = vst [vmem:[%s1244 + $0x48] sm:$0xff] %v1255
                %v1257 = vld [vmem:[%s1243 + $0x30] sm:$0xff]
                %1258 = vst [vmem:[%s1244 + $0x50] sm:$0xff] %v1257
                %v1259 = vld [vmem:[%s1243 + $0x38] sm:$0xff]
                %1260 = vst [vmem:[%s1244 + $0x58] sm:$0xff] %v1259
              $region100: #{decoder_block_forward.1} parent=94 // loop_footer
                %s1242 = sadd.s32 1, %s1238
              $region101: #{decoder_block_forward.1} parent=94 // loop_footer_branch
                %1237 = sbr.rel target = $region97
              $region102: #{decoder_block_forward.1} parent=94 // loop_exit
                _
            $region95: #{decoder_block_forward.1} parent=90 // pred_fallthru
              _
            // Predicated region
            $region103: #{decoder_block_forward.1} parent=90 // pred_check
              _
            $region104: #{decoder_block_forward.1} parent=90 // pred_check_branch
              %1262 = sbr.rel target = $region106
            $region105: #{decoder_block_forward.1} parent=90 // pred_region
              _
            $region106: #{decoder_block_forward.1} parent=90 // pred_fallthru
              _
          $region91: #{decoder_block_forward.1} parent=86 // pred_fallthru
            _
          %1263 = vnop
        $region87: #{decoder_block_forward.1} parent=74 // pred_fallthru
          _
      $region75: #{decoder_block_forward.1} parent=5 // pred_fallthru
        _
      %p1264 = scmp.le.s32.totalorder 2, %s15
      // Predicated region
      $region107: #{decoder_block_forward.1} parent=5 // pred_check
        %p1265 = pneg %p1264
      $region108: #{decoder_block_forward.1} parent=5 // pred_check_branch
        %1267 = sbr.rel (%p1265) target = $region110
      $region109: #{decoder_block_forward.1} parent=5 // pred_region
        %s1268 = ssub.s32 %s15, 2
        // Predicated region
        $region111: #{decoder_block_forward.1} parent=109 // pred_check
          %p1269 = pneg %p264
        $region112: #{decoder_block_forward.1} parent=109 // pred_check_branch
          %1271 = sbr.rel (%p1269) target = $region114
        $region113: #{decoder_block_forward.1} parent=109 // pred_region
          %s1272 = sand.u32 %s249, 1
          %s1273 = sand.u32 %s249, 1
          %s1274 = smul.addr %s1273, 64
          %s1275 = scalar_lea.vmem [#allocation4], %s1274
        $region114: #{decoder_block_forward.1} parent=109 // pred_fallthru
          _
      $region110: #{decoder_block_forward.1} parent=5 // pred_fallthru
        _
    $region6: #{decoder_block_forward.1} parent=1 // loop_footer
      %s19 = sadd.s32 1, %s15
    $region7: #{decoder_block_forward.1} parent=1 // loop_footer_branch
      %14 = sbr.rel target = $region3
    $region8: #{decoder_block_forward.1} parent=1 // loop_exit
      _

// kernel: decoder_block_forward.1
$region0: #{decoder_block_forward.1}
  #allocation0 [shape = 'u32[]', space=smem, size = 0x4, offset = 0x4, fixed_abs, tag = 'smem constant byte address 0x4 - core index']
  #allocation1 [shape = 'u32[72,128]{1,0:T(1,128)}', space=vmem, size = 0x9000, scoped, tag = 'internal scratch']
  #allocation2 [shape = 'bf16[4,256]{1,0:T(4,128)(2,1)}', space=vmem, size = 0x800, scoped, tag = 'scratch operand']
  %s0 = inlined_call_operand.vmem [shape: bf16[2,16,256], index: 0, kind: input, shape index: {}]
  %s1 = inlined_call_operand.vmem [shape: bf16[4,16], index: 1, kind: input, shape index: {}]
  %s2 = inlined_call_operand.vmem [shape: f32[4,1], index: 2, kind: input, shape index: {}]
  %s3 = inlined_call_operand.vmem [shape: f32[4,1], index: 3, kind: input, shape index: {}]
  %s4 = inlined_call_operand.vmem [shape: f32[4,1], index: 4, kind: input, shape index: {}]
  %s5 = inlined_call_operand.vmem [shape: bf16[256,1024], index: 5, kind: input, shape index: {}]
  %s6 = inlined_call_operand.vmem [shape: bf16[8,4], index: 6, kind: input, shape index: {}]
  %s7 = inlined_call_operand.vmem [shape: f32[8,1], index: 7, kind: input, shape index: {}]
  %s8 = inlined_call_operand.vmem [shape: f32[2,8,1024], index: 8, kind: input, shape index: {}]
  %s9 = inlined_call_operand.vmem [shape: f32[2,16,1024], index: 9, kind: output, shape index: {}]
  %s10 = sld [smem:[#allocation0]]
  $region115: #{decoder_block_forward.1} parent=0
    _
  %s12 = ssub.s32 1, %s10
  %s13 = scalar_select 0, %s12, %s10
  $region1: #{decoder_block_forward.1} parent=0
    #allocation3 [shape = 'u8[524288]{0}', space=vmem, size = 0x80000, scoped, tag = 'input window, operand 5']
    #allocation4 [shape = 'u8[65536]{0}', space=vmem, size = 0x10000, scoped, tag = 'output window, operand 0']
    loop: start=0, step=1, limit=6
    $region2: #{decoder_block_forward.1} parent=1 // loop_pre_header
      _
    $region3: #{decoder_block_forward.1} parent=1 // loop_header
      %s15 = sphi 0, %s19
      %p16 = scmp.ge.s32.totalorder %s15, 6
      %s22 = sphi 0, %s34
      %s23 = sphi 0, %s30
      %s24 = sphi 0, %s22
      %s25 = sphi 0, %s23
      %s26 = sphi 0, %s24
      %s27 = sphi 0, %s25
      %s37 = sphi 0, %s39
      %s40 = sphi 0, %s37
      %s41 = sphi 0, %s40
      %s57 = sphi 0, %s41
      %s61 = sphi 0, %s61
      %s63 = sphi 0, %s61
      %s64 = sphi 0, %s63
      %s78 = sphi 0, %s64
      %s82 = sphi 0, %s82
      %s84 = sphi 0, %s82
      %s85 = sphi 0, %s84
      %s99 = sphi 0, %s85
      %s103 = sphi 0, %s103
      %s105 = sphi 0, %s103
      %s106 = sphi 0, %s105
      %s120 = sphi 0, %s106
      %s124 = sphi 0, %s124
      %s126 = sphi 0, %s124
      %s127 = sphi 0, %s126
      %s141 = sphi 0, %s127
      %s147 = sphi 0, %s149
      %s150 = sphi 0, %s147
      %s151 = sphi 0, %s150
      %s167 = sphi 0, %s151
      %s171 = sphi 0, %s171
      %s173 = sphi 0, %s171
      %s174 = sphi 0, %s173
      %s188 = sphi 0, %s174
      %s192 = sphi 0, %s192
      %s194 = sphi 0, %s192
      %s195 = sphi 0, %s194
      %s209 = sphi 0, %s195
      %s217 = sphi 0, %s219
      %s220 = sphi 0, %s217
      %s221 = sphi 0, %s220
      %s237 = sphi 0, %s221
      %s245 = sphi 0, %s247
      %s248 = sphi 0, %s245
      %s249 = sphi 0, %s248
      %s265 = sphi 0, %s249
    $region4: #{decoder_block_forward.1} parent=1 // loop_header_branch
      %18 = sbr.rel (%p16) target = $region8
    $region5: #{decoder_block_forward.1} parent=1 // loop_body
      %s20 = ssub.s32 %s15, 1
      %s21 = ssub.s32 %s15, 2
      %s28 = sadd.s32 1, %s23
      %p29 = scmp.ge.s32.totalorder %s28, 2
      %s30 = scalar_select %p29, 0, %s28
      %s31 = sadd.s32 1, %s22
      %s32 = scalar_select %p29, %s31, %s22
      %p33 = scmp.ge.s32.totalorder %s32, 2
      %s34 = scalar_select %p33, 0, %s32
      %s35 = ssub.s32 %s22, %s34
      %p36 = scmp.eq.s32.totalorder %s35, 0
      %s38 = sadd.s32 %s37, 1
      %s39 = scalar_select %p36, %s37, %s38
      %p42 = pneg %p36
      %p43 = scmp.eq.s32.totalorder %s15, 3
      %p44 = por %p42, %p43
      %p45 = scmp.ne.s32.totalorder %s37, %s40
      %p46 = scmp.eq.s32.totalorder %s15, 0
      %p47 = por %p45, %p46
      %p48 = scmp.ne.s32.totalorder %s37, %s40
      %p49 = scmp.eq.s32.totalorder %s20, 3
      %p50 = por %p48, %p49
      %p51 = scmp.ne.s32.totalorder %s40, %s41
      %p52 = scmp.eq.s32.totalorder %s20, 0
      %p53 = por %p51, %p52
      %p54 = scmp.ne.s32.totalorder %s40, %s41
      %p55 = scmp.eq.s32.totalorder %s21, 3
      %p56 = por %p54, %p55
      %p58 = scmp.ne.s32.totalorder %s41, %s57
      %p59 = scmp.eq.s32.totalorder %s21, 0
      %p60 = por %p58, %p59
      %s62 = sadd.s32 %s61, 1
      %p65 = scmp.eq.s32.totalorder %s15, 3
      %p66 = scmp.ne.s32.totalorder %s61, %s63
      %p67 = scmp.eq.s32.totalorder %s15, 0
      %p68 = por %p66, %p67
      %p69 = scmp.ne.s32.totalorder %s61, %s63
      %p70 = scmp.eq.s32.totalorder %s20, 3
      %p71 = por %p69, %p70
      %p72 = scmp.ne.s32.totalorder %s63, %s64
      %p73 = scmp.eq.s32.totalorder %s20, 0
      %p74 = por %p72, %p73
      %p75 = scmp.ne.s32.totalorder %s63, %s64
      %p76 = scmp.eq.s32.totalorder %s21, 3
      %p77 = por %p75, %p76
      %p79 = scmp.ne.s32.totalorder %s64, %s78
      %p80 = scmp.eq.s32.totalorder %s21, 0
      %p81 = por %p79, %p80
      %s83 = sadd.s32 %s82, 1
      %p86 = scmp.eq.s32.totalorder %s15, 3
      %p87 = scmp.ne.s32.totalorder %s82, %s84
      %p88 = scmp.eq.s32.totalorder %s15, 0
      %p89 = por %p87, %p88
      %p90 = scmp.ne.s32.totalorder %s82, %s84
      %p91 = scmp.eq.s32.totalorder %s20, 3
      %p92 = por %p90, %p91
      %p93 = scmp.ne.s32.totalorder %s84, %s85
      %p94 = scmp.eq.s32.totalorder %s20, 0
      %p95 = por %p93, %p94
      %p96 = scmp.ne.s32.totalorder %s84, %s85
      %p97 = scmp.eq.s32.totalorder %s21, 3
      %p98 = por %p96, %p97
      %p100 = scmp.ne.s32.totalorder %s85, %s99
      %p101 = scmp.eq.s32.totalorder %s21, 0
      %p102 = por %p100, %p101
      %s104 = sadd.s32 %s103, 1
      %p107 = scmp.eq.s32.totalorder %s15, 3
      %p108 = scmp.ne.s32.totalorder %s103, %s105
      %p109 = scmp.eq.s32.totalorder %s15, 0
      %p110 = por %p108, %p109
      %p111 = scmp.ne.s32.totalorder %s103, %s105
      %p112 = scmp.eq.s32.totalorder %s20, 3
      %p113 = por %p111, %p112
      %p114 = scmp.ne.s32.totalorder %s105, %s106
      %p115 = scmp.eq.s32.totalorder %s20, 0
      %p116 = por %p114, %p115
      %p117 = scmp.ne.s32.totalorder %s105, %s106
      %p118 = scmp.eq.s32.totalorder %s21, 3
      %p119 = por %p117, %p118
      %p121 = scmp.ne.s32.totalorder %s106, %s120
      %p122 = scmp.eq.s32.totalorder %s21, 0
      %p123 = por %p121, %p122
      %s125 = sadd.s32 %s124, 1
      %p128 = scmp.eq.s32.totalorder %s15, 3
      %p129 = scmp.ne.s32.totalorder %s124, %s126
      %p130 = scmp.eq.s32.totalorder %s15, 0
      %p131 = por %p129, %p130
      %p132 = scmp.ne.s32.totalorder %s124, %s126
      %p133 = scmp.eq.s32.totalorder %s20, 3
      %p134 = por %p132, %p133
      %p135 = scmp.ne.s32.totalorder %s126, %s127
      %p136 = scmp.eq.s32.totalorder %s20, 0
      %p137 = por %p135, %p136
      %p138 = scmp.ne.s32.totalorder %s126, %s127
      %p139 = scmp.eq.s32.totalorder %s21, 3
      %p140 = por %p138, %p139
      %p142 = scmp.ne.s32.totalorder %s127, %s141
      %p143 = scmp.eq.s32.totalorder %s21, 0
      %p144 = por %p142, %p143
      %s145 = ssub.s32 %s23, %s30
      %p146 = scmp.eq.s32.totalorder %s145, 0
      %s148 = sadd.s32 %s147, 1
      %s149 = scalar_select %p146, %s147, %s148
      %p152 = pneg %p146
      %p153 = scmp.eq.s32.totalorder %s15, 3
      %p154 = por %p152, %p153
      %p155 = scmp.ne.s32.totalorder %s147, %s150
      %p156 = scmp.eq.s32.totalorder %s15, 0
      %p157 = por %p155, %p156
      %p158 = scmp.ne.s32.totalorder %s147, %s150
      %p159 = scmp.eq.s32.totalorder %s20, 3
      %p160 = por %p158, %p159
      %p161 = scmp.ne.s32.totalorder %s150, %s151
      %p162 = scmp.eq.s32.totalorder %s20, 0
      %p163 = por %p161, %p162
      %p164 = scmp.ne.s32.totalorder %s150, %s151
      %p165 = scmp.eq.s32.totalorder %s21, 3
      %p166 = por %p164, %p165
      %p168 = scmp.ne.s32.totalorder %s151, %s167
      %p169 = scmp.eq.s32.totalorder %s21, 0
      %p170 = por %p168, %p169
      %s172 = sadd.s32 %s171, 1
      %p175 = scmp.eq.s32.totalorder %s15, 3
      %p176 = scmp.ne.s32.totalorder %s171, %s173
      %p177 = scmp.eq.s32.totalorder %s15, 0
      %p178 = por %p176, %p177
      %p179 = scmp.ne.s32.totalorder %s171, %s173
      %p180 = scmp.eq.s32.totalorder %s20, 3
      %p181 = por %p179, %p180
      %p182 = scmp.ne.s32.totalorder %s173, %s174
      %p183 = scmp.eq.s32.totalorder %s20, 0
      %p184 = por %p182, %p183
      %p185 = scmp.ne.s32.totalorder %s173, %s174
      %p186 = scmp.eq.s32.totalorder %s21, 3
      %p187 = por %p185, %p186
      %p189 = scmp.ne.s32.totalorder %s174, %s188
      %p190 = scmp.eq.s32.totalorder %s21, 0
      %p191 = por %p189, %p190
      %s193 = sadd.s32 %s192, 1
      %p196 = scmp.eq.s32.totalorder %s15, 3
      %p197 = scmp.ne.s32.totalorder %s192, %s194
      %p198 = scmp.eq.s32.totalorder %s15, 0
      %p199 = por %p197, %p198
      %p200 = scmp.ne.s32.totalorder %s192, %s194
      %p201 = scmp.eq.s32.totalorder %s20, 3
      %p202 = por %p200, %p201
      %p203 = scmp.ne.s32.totalorder %s194, %s195
      %p204 = scmp.eq.s32.totalorder %s20, 0
      %p205 = por %p203, %p204
      %p206 = scmp.ne.s32.totalorder %s194, %s195
      %p207 = scmp.eq.s32.totalorder %s21, 3
      %p208 = por %p206, %p207
      %p210 = scmp.ne.s32.totalorder %s195, %s209
      %p211 = scmp.eq.s32.totalorder %s21, 0
      %p212 = por %p210, %p211
      %s213 = ssub.s32 %s22, %s34
      %s214 = ssub.s32 %s23, %s30
      %s215 = sor.u32 %s213, %s214
      %p216 = scmp.eq.s32.totalorder %s215, 0
      %s218 = sadd.s32 %s217, 1
      %s219 = scalar_select %p216, %s217, %s218
      %p222 = pneg %p216
      %p223 = scmp.eq.s32.totalorder %s15, 3
      %p224 = por %p222, %p223
      %p225 = scmp.ne.s32.totalorder %s217, %s220
      %p226 = scmp.eq.s32.totalorder %s15, 0
      %p227 = por %p225, %p226
      %p228 = scmp.ne.s32.totalorder %s217, %s220
      %p229 = scmp.eq.s32.totalorder %s20, 3
      %p230 = por %p228, %p229
      %p231 = scmp.ne.s32.totalorder %s220, %s221
      %p232 = scmp.eq.s32.totalorder %s20, 0
      %p233 = por %p231, %p232
      %p234 = scmp.ne.s32.totalorder %s220, %s221
      %p235 = scmp.eq.s32.totalorder %s21, 3
      %p236 = por %p234, %p235
      %p238 = scmp.ne.s32.totalorder %s221, %s237
      %p239 = scmp.eq.s32.totalorder %s21, 0
      %p240 = por %p238, %p239
      %s241 = ssub.s32 %s22, %s34
      %s242 = ssub.s32 %s23, %s30
      %s243 = sor.u32 %s241, %s242
      %p244 = scmp.eq.s32.totalorder %s243, 0
      %s246 = sadd.s32 %s245, 1
      %s247 = scalar_select %p244, %s245, %s246
      %p250 = pneg %p244
      %p251 = scmp.eq.s32.totalorder %s15, 3
      %p252 = por %p250, %p251
      %p253 = scmp.ne.s32.totalorder %s245, %s248
      %p254 = scmp.eq.s32.totalorder %s15, 0
      %p255 = por %p253, %p254
      %p256 = scmp.ne.s32.totalorder %s245, %s248
      %p257 = scmp.eq.s32.totalorder %s20, 3
      %p258 = por %p256, %p257
      %p259 = scmp.ne.s32.totalorder %s248, %s249
      %p260 = scmp.eq.s32.totalorder %s20, 0
      %p261 = por %p259, %p260
      %p262 = scmp.ne.s32.totalorder %s248, %s249
      %p263 = scmp.eq.s32.totalorder %s21, 3
      %p264 = por %p262, %p263
      %p266 = scmp.ne.s32.totalorder %s249, %s265
      %p267 = scmp.eq.s32.totalorder %s21, 0
      %p268 = por %p266, %p267
      %p269 = scmp.le.s32.totalorder 1, %s15
      %p270 = scmp.lt.s32.totalorder %s15, 5
      %p271 = pnand %p269, %p270
      %p272 = pneg %p271
      // Predicated region
      $region9: #{decoder_block_forward.1} parent=5 // pred_check
        _
      $region10: #{decoder_block_forward.1} parent=5 // pred_check_branch
        %274 = sbr.rel (%p271) target = $region12
      $region11: #{decoder_block_forward.1} parent=5 // pred_region
        %s275 = ssub.s32 %s15, 1
        // Predicated region
        $region13: #{decoder_block_forward.1} parent=11 // pred_check
          %p276 = pneg %p74
        $region14: #{decoder_block_forward.1} parent=11 // pred_check_branch
          %278 = sbr.rel (%p276) target = $region16
        $region15: #{decoder_block_forward.1} parent=11 // pred_region
          _
        $region16: #{decoder_block_forward.1} parent=11 // pred_fallthru
          _
        // Predicated region
        $region17: #{decoder_block_forward.1} parent=11 // pred_check
          %p279 = pneg %p95
        $region18: #{decoder_block_forward.1} parent=11 // pred_check_branch
          %281 = sbr.rel (%p279) target = $region20
        $region19: #{decoder_block_forward.1} parent=11 // pred_region
          _
        $region20: #{decoder_block_forward.1} parent=11 // pred_fallthru
          _
        // Predicated region
        $region21: #{decoder_block_forward.1} parent=11 // pred_check
          %p282 = pneg %p116
        $region22: #{decoder_block_forward.1} parent=11 // pred_check_branch
          %284 = sbr.rel (%p282) target = $region24
        $region23: #{decoder_block_forward.1} parent=11 // pred_region
          _
        $region24: #{decoder_block_forward.1} parent=11 // pred_fallthru
          _
        // Predicated region
        $region25: #{decoder_block_forward.1} parent=11 // pred_check
          %p285 = pneg %p137
        $region26: #{decoder_block_forward.1} parent=11 // pred_check_branch
          %287 = sbr.rel (%p285) target = $region28
        $region27: #{decoder_block_forward.1} parent=11 // pred_region
          _
        $region28: #{decoder_block_forward.1} parent=11 // pred_fallthru
          _
        // Predicated region
        $region29: #{decoder_block_forward.1} parent=11 // pred_check
          %p288 = pneg %p184
        $region30: #{decoder_block_forward.1} parent=11 // pred_check_branch
          %290 = sbr.rel (%p288) target = $region32
        $region31: #{decoder_block_forward.1} parent=11 // pred_region
          _
        $region32: #{decoder_block_forward.1} parent=11 // pred_fallthru
          _
        // Predicated region
        $region33: #{decoder_block_forward.1} parent=11 // pred_check
          %p291 = pneg %p205
        $region34: #{decoder_block_forward.1} parent=11 // pred_check_branch
          %293 = sbr.rel (%p291) target = $region36
        $region35: #{decoder_block_forward.1} parent=11 // pred_region
          _
        $region36: #{decoder_block_forward.1} parent=11 // pred_fallthru
          _
      $region12: #{decoder_block_forward.1} parent=5 // pred_fallthru
        _
      %p294 = scmp.lt.s32.totalorder %s15, 4
      // Predicated region
      $region37: #{decoder_block_forward.1} parent=5 // pred_check
        %p295 = pneg %p294
      $region38: #{decoder_block_forward.1} parent=5 // pred_check_branch
        %297 = sbr.rel (%p295) target = $region40
      $region39: #{decoder_block_forward.1} parent=5 // pred_region
        // Predicated region
        $region41: #{decoder_block_forward.1} parent=39 // pred_check
          %p298 = pneg %p47
        $region42: #{decoder_block_forward.1} parent=39 // pred_check_branch
          %300 = sbr.rel (%p298) target = $region44
        $region43: #{decoder_block_forward.1} parent=39 // pred_region
          %p301 = scmp.lt.s32.totalorder %s22, 1
          %s302 = scalar_select %p301, %s22, 1
          %s303 = smul.addr %s302, 4
          %s304 = smul.addr %s303, 4
          %s305 = scalar_lea.vmem %s0, %s304
        $region44: #{decoder_block_forward.1} parent=39 // pred_fallthru
          _
        // Predicated region
        $region45: #{decoder_block_forward.1} parent=39 // pred_check
          %p306 = pneg %p157
        $region46: #{decoder_block_forward.1} parent=39 // pred_check_branch
          %308 = sbr.rel (%p306) target = $region48
        $region47: #{decoder_block_forward.1} parent=39 // pred_region
          %s309 = sand.u32 %s147, 1
          %s310 = sand.u32 %s147, 1
          %s311 = smul.addr %s310, 512
          %s312 = scalar_lea.vmem [#allocation3], %s311
          %s313 = smul.u32 4, %s23
          %s314 = smul.addr %s313, 4
          %s315 = scalar_lea.vmem %s5, %s314
          // Predicated region
          $region49: #{decoder_block_forward.1} parent=47 // pred_check
            _
          $region50: #{decoder_block_forward.1} parent=47 // pred_check_branch
            %317 = sbr.rel (0) target = $region52
          $region51: #{decoder_block_forward.1} parent=47 // pred_region
            // Predicated region
            $region53: #{decoder_block_forward.1} parent=51 // pred_check
              _
            $region54: #{decoder_block_forward.1} parent=51 // pred_check_branch
              %319 = sbr.rel (0) target = $region56
            $region55: #{decoder_block_forward.1} parent=51 // pred_region
              loop: start=0, step=1, limit=1
              $region57: #{decoder_block_forward.1} parent=55 // loop_pre_header
                _
              $region58: #{decoder_block_forward.1} parent=55 // loop_header
                %s321 = sphi 0, %s325
                %p322 = scmp.ge.s32.totalorder %s321, 1
                %s326 = sphi %s315, %s315
                %s327 = sphi %s312, %s312
              $region59: #{decoder_block_forward.1} parent=55 // loop_header_branch
                %324 = sbr.rel (%p322) target = $region63
              $region60: #{decoder_block_forward.1} parent=55 // loop_body
                %v328 = vld [vmem:[%s326] sm:$0xff]
                %329 = vst [vmem:[%s327] sm:$0xff] %v328
                %v330 = vld [vmem:[%s326 + $0x8] sm:$0xff]
                %331 = vst [vmem:[%s327 + $0x8] sm:$0xff] %v330
                %v332 = vld [vmem:[%s326 + $0x20] sm:$0xff]
                %333 = vst [vmem:[%s327 + $0x10] sm:$0xff] %v332
                %v334 = vld [vmem:[%s326 + $0x28] sm:$0xff]
                %335 = vst [vmem:[%s327 + $0x18] sm:$0xff] %v334
                %v336 = vld [vmem:[%s326 + $0x40] sm:$0xff]
                %337 = vst [vmem:[%s327 + $0x20] sm:$0xff] %v336
                %v338 = vld [vmem:[%s326 + $0x48] sm:$0xff]
                %339 = vst [vmem:[%s327 + $0x28] sm:$0xff] %v338
                %v340 = vld [vmem:[%s326 + $0x60] sm:$0xff]
                %341 = vst [vmem:[%s327 + $0x30] sm:$0xff] %v340
                %v342 = vld [vmem:[%s326 + $0x68] sm:$0xff]
                %343 = vst [vmem:[%s327 + $0x38] sm:$0xff] %v342
                %v344 = vld [vmem:[%s326 + $0x80] sm:$0xff]
                %345 = vst [vmem:[%s327 + $0x40] sm:$0xff] %v344
                %v346 = vld [vmem:[%s326 + $0x88] sm:$0xff]
                %347 = vst [vmem:[%s327 + $0x48] sm:$0xff] %v346
                %v348 = vld [vmem:[%s326 + $0xa0] sm:$0xff]
                %349 = vst [vmem:[%s327 + $0x50] sm:$0xff] %v348
                %v350 = vld [vmem:[%s326 + $0xa8] sm:$0xff]
                %351 = vst [vmem:[%s327 + $0x58] sm:$0xff] %v350
                %v352 = vld [vmem:[%s326 + $0xc0] sm:$0xff]
                %353 = vst [vmem:[%s327 + $0x60] sm:$0xff] %v352
                %v354 = vld [vmem:[%s326 + $0xc8] sm:$0xff]
                %355 = vst [vmem:[%s327 + $0x68] sm:$0xff] %v354
                %v356 = vld [vmem:[%s326 + $0xe0] sm:$0xff]
                %357 = vst [vmem:[%s327 + $0x70] sm:$0xff] %v356
                %v358 = vld [vmem:[%s326 + $0xe8] sm:$0xff]
                %359 = vst [vmem:[%s327 + $0x78] sm:$0xff] %v358
                %v360 = vld [vmem:[%s326 + $0x100] sm:$0xff]
                %361 = vst [vmem:[%s327 + $0x80] sm:$0xff] %v360
                %v362 = vld [vmem:[%s326 + $0x108] sm:$0xff]
                %363 = vst [vmem:[%s327 + $0x88] sm:$0xff] %v362
                %v364 = vld [vmem:[%s326 + $0x120] sm:$0xff]
                %365 = vst [vmem:[%s327 + $0x90] sm:$0xff] %v364
                %v366 = vld [vmem:[%s326 + $0x128] sm:$0xff]
                %367 = vst [vmem:[%s327 + $0x98] sm:$0xff] %v366
                %v368 = vld [vmem:[%s326 + $0x140] sm:$0xff]
                %369 = vst [vmem:[%s327 + $0xa0] sm:$0xff] %v368
                %v370 = vld [vmem:[%s326 + $0x148] sm:$0xff]
                %371 = vst [vmem:[%s327 + $0xa8] sm:$0xff] %v370
                %v372 = vld [vmem:[%s326 + $0x160] sm:$0xff]
                %373 = vst [vmem:[%s327 + $0xb0] sm:$0xff] %v372
                %v374 = vld [vmem:[%s326 + $0x168] sm:$0xff]
                %375 = vst [vmem:[%s327 + $0xb8] sm:$0xff] %v374
                %v376 = vld [vmem:[%s326 + $0x180] sm:$0xff]
                %377 = vst [vmem:[%s327 + $0xc0] sm:$0xff] %v376
                %v378 = vld [vmem:[%s326 + $0x188] sm:$0xff]
                %379 = vst [vmem:[%s327 + $0xc8] sm:$0xff] %v378
                %v380 = vld [vmem:[%s326 + $0x1a0] sm:$0xff]
                %381 = vst [vmem:[%s327 + $0xd0] sm:$0xff] %v380
                %v382 = vld [vmem:[%s326 + $0x1a8] sm:$0xff]
                %383 = vst [vmem:[%s327 + $0xd8] sm:$0xff] %v382
                %v384 = vld [vmem:[%s326 + $0x1c0] sm:$0xff]
                %385 = vst [vmem:[%s327 + $0xe0] sm:$0xff] %v384
                %v386 = vld [vmem:[%s326 + $0x1c8] sm:$0xff]
                %387 = vst [vmem:[%s327 + $0xe8] sm:$0xff] %v386
                %v388 = vld [vmem:[%s326 + $0x1e0] sm:$0xff]
                %389 = vst [vmem:[%s327 + $0xf0] sm:$0xff] %v388
                %v390 = vld [vmem:[%s326 + $0x1e8] sm:$0xff]
                %391 = vst [vmem:[%s327 + $0xf8] sm:$0xff] %v390
                %v392 = vld [vmem:[%s326 + $0x200] sm:$0xff]
                %393 = vst [vmem:[%s327 + $0x100] sm:$0xff] %v392
                %v394 = vld [vmem:[%s326 + $0x208] sm:$0xff]
                %395 = vst [vmem:[%s327 + $0x108] sm:$0xff] %v394
                %v396 = vld [vmem:[%s326 + $0x220] sm:$0xff]
                %397 = vst [vmem:[%s327 + $0x110] sm:$0xff] %v396
                %v398 = vld [vmem:[%s326 + $0x228] sm:$0xff]
                %399 = vst [vmem:[%s327 + $0x118] sm:$0xff] %v398
                %v400 = vld [vmem:[%s326 + $0x240] sm:$0xff]
                %401 = vst [vmem:[%s327 + $0x120] sm:$0xff] %v400
                %v402 = vld [vmem:[%s326 + $0x248] sm:$0xff]
                %403 = vst [vmem:[%s327 + $0x128] sm:$0xff] %v402
                %v404 = vld [vmem:[%s326 + $0x260] sm:$0xff]
                %405 = vst [vmem:[%s327 + $0x130] sm:$0xff] %v404
                %v406 = vld [vmem:[%s326 + $0x268] sm:$0xff]
                %407 = vst [vmem:[%s327 + $0x138] sm:$0xff] %v406
                %v408 = vld [vmem:[%s326 + $0x280] sm:$0xff]
                %409 = vst [vmem:[%s327 + $0x140] sm:$0xff] %v408
                %v410 = vld [vmem:[%s326 + $0x288] sm:$0xff]
                %411 = vst [vmem:[%s327 + $0x148] sm:$0xff] %v410
                %v412 = vld [vmem:[%s326 + $0x2a0] sm:$0xff]
                %413 = vst [vmem:[%s327 + $0x150] sm:$0xff] %v412
                %v414 = vld [vmem:[%s326 + $0x2a8] sm:$0xff]
                %415 = vst [vmem:[%s327 + $0x158] sm:$0xff] %v414
                %v416 = vld [vmem:[%s326 + $0x2c0] sm:$0xff]
                %417 = vst [vmem:[%s327 + $0x160] sm:$0xff] %v416
                %v418 = vld [vmem:[%s326 + $0x2c8] sm:$0xff]
                %419 = vst [vmem:[%s327 + $0x168] sm:$0xff] %v418
                %v420 = vld [vmem:[%s326 + $0x2e0] sm:$0xff]
                %421 = vst [vmem:[%s327 + $0x170] sm:$0xff] %v420
                %v422 = vld [vmem:[%s326 + $0x2e8] sm:$0xff]
                %423 = vst [vmem:[%s327 + $0x178] sm:$0xff] %v422
                %v424 = vld [vmem:[%s326 + $0x300] sm:$0xff]
                %425 = vst [vmem:[%s327 + $0x180] sm:$0xff] %v424
                %v426 = vld [vmem:[%s326 + $0x308] sm:$0xff]
                %427 = vst [vmem:[%s327 + $0x188] sm:$0xff] %v426
                %v428 = vld [vmem:[%s326 + $0x320] sm:$0xff]
                %429 = vst [vmem:[%s327 + $0x190] sm:$0xff] %v428
                %v430 = vld [vmem:[%s326 + $0x328] sm:$0xff]
                %431 = vst [vmem:[%s327 + $0x198] sm:$0xff] %v430
                %v432 = vld [vmem:[%s326 + $0x340] sm:$0xff]
                %433 = vst [vmem:[%s327 + $0x1a0] sm:$0xff] %v432
                %v434 = vld [vmem:[%s326 + $0x348] sm:$0xff]
                %435 = vst [vmem:[%s327 + $0x1a8] sm:$0xff] %v434
                %v436 = vld [vmem:[%s326 + $0x360] sm:$0xff]
                %437 = vst [vmem:[%s327 + $0x1b0] sm:$0xff] %v436
                %v438 = vld [vmem:[%s326 + $0x368] sm:$0xff]
                %439 = vst [vmem:[%s327 + $0x1b8] sm:$0xff] %v438
                %v440 = vld [vmem:[%s326 + $0x380] sm:$0xff]
                %441 = vst [vmem:[%s327 + $0x1c0] sm:$0xff] %v440
                %v442 = vld [vmem:[%s326 + $0x388] sm:$0xff]
                %443 = vst [vmem:[%s327 + $0x1c8] sm:$0xff] %v442
                %v444 = vld [vmem:[%s326 + $0x3a0] sm:$0xff]
                %445 = vst [vmem:[%s327 + $0x1d0] sm:$0xff] %v444
                %v446 = vld [vmem:[%s326 + $0x3a8] sm:$0xff]
                %447 = vst [vmem:[%s327 + $0x1d8] sm:$0xff] %v446
                %v448 = vld [vmem:[%s326 + $0x3c0] sm:$0xff]
                %449 = vst [vmem:[%s327 + $0x1e0] sm:$0xff] %v448
                %v450 = vld [vmem:[%s326 + $0x3c8] sm:$0xff]
                %451 = vst [vmem:[%s327 + $0x1e8] sm:$0xff] %v450
                %v452 = vld [vmem:[%s326 + $0x3e0] sm:$0xff]
                %453 = vst [vmem:[%s327 + $0x1f0] sm:$0xff] %v452
                %v454 = vld [vmem:[%s326 + $0x3e8] sm:$0xff]
                %455 = vst [vmem:[%s327 + $0x1f8] sm:$0xff] %v454
              $region61: #{decoder_block_forward.1} parent=55 // loop_footer
                %s325 = sadd.s32 1, %s321
              $region62: #{decoder_block_forward.1} parent=55 // loop_footer_branch
                %320 = sbr.rel target = $region58
              $region63: #{decoder_block_forward.1} parent=55 // loop_exit
                _
            $region56: #{decoder_block_forward.1} parent=51 // pred_fallthru
              _
            // Predicated region
            $region64: #{decoder_block_forward.1} parent=51 // pred_check
              _
            $region65: #{decoder_block_forward.1} parent=51 // pred_check_branch
              %457 = sbr.rel target = $region67
            $region66: #{decoder_block_forward.1} parent=51 // pred_region
              _
            $region67: #{decoder_block_forward.1} parent=51 // pred_fallthru
              _
          $region52: #{decoder_block_forward.1} parent=47 // pred_fallthru
            _
          %458 = vnop
        $region48: #{decoder_block_forward.1} parent=39 // pred_fallthru
          _
        // Predicated region
        $region68: #{decoder_block_forward.1} parent=39 // pred_check
          %p459 = pneg %p227
        $region69: #{decoder_block_forward.1} parent=39 // pred_check_branch
          %461 = sbr.rel (%p459) target = $region71
        $region70: #{decoder_block_forward.1} parent=39 // pred_region
          %s462 = smul.u32 4, %s23
          %p463 = scmp.lt.s32.totalorder %s22, 1
          %s464 = scalar_select %p463, %s22, 1
          %p465 = scmp.lt.s32.totalorder %s462, 7
          %s466 = scalar_select %p465, %s462, 7
          %s467 = smul.addr %s464, 8
          %s468 = sadd.s32 %s466, %s467
          %s469 = smul.addr %s468, 8
          %s470 = scalar_lea.vmem %s8, %s469
          %s471 = smul.u32 4, %s23
        $region71: #{decoder_block_forward.1} parent=39 // pred_fallthru
          _
      $region40: #{decoder_block_forward.1} parent=5 // pred_fallthru
        _
      %p472 = scmp.le.s32.totalorder 1, %s15
      %p473 = scmp.lt.s32.totalorder %s15, 5
      %p474 = pnand %p472, %p473
      %p475 = pneg %p474
      // Predicated region
      $region72: #{decoder_block_forward.1} parent=5 // pred_check
        _
      $region73: #{decoder_block_forward.1} parent=5 // pred_check_branch
        %477 = sbr.rel (%p474) target = $region75
      $region74: #{decoder_block_forward.1} parent=5 // pred_region
        %s478 = ssub.s32 %s15, 1
        %s479 = sand.u32 %s150, 1
        %s480 = sand.u32 %s150, 1
        %s481 = smul.addr %s480, 512
        %s482 = scalar_lea.vmem [#allocation3], %s481
        // Predicated region
        $region76: #{decoder_block_forward.1} parent=74 // pred_check
          %p483 = pneg %p163
        $region77: #{decoder_block_forward.1} parent=74 // pred_check_branch
          %485 = sbr.rel (%p483) target = $region79
        $region78: #{decoder_block_forward.1} parent=74 // pred_region
          _
        $region79: #{decoder_block_forward.1} parent=74 // pred_fallthru
          _
        %p486 = scmp.lt.s32.totalorder %s24, 1
        %s487 = scalar_select %p486, %s24, 1
        %s488 = smul.addr %s487, 4
        %s489 = smul.addr %s488, 4
        %s490 = scalar_lea.vmem %s0, %s489
        %p491 = pneg %p53
        %p492 = pneg %p50
        %p493 = pneg %p74
        %p494 = pneg %p71
        %p495 = pneg %p95
        %p496 = pneg %p92
        %p497 = pneg %p116
        %p498 = pneg %p113
        %p499 = pneg %p137
        %p500 = pneg %p134
        %s501 = sand.u32 %s150, 1
        %s502 = sand.u32 %s150, 1
        %s503 = smul.addr %s502, 512
        %s504 = scalar_lea.vmem [#allocation3], %s503
        %p505 = pneg %p163
        %p506 = pneg %p160
        %p507 = pneg %p184
        %p508 = pneg %p181
        %p509 = pneg %p205
        %p510 = pneg %p202
        %s511 = smul.u32 4, %s25
        %p512 = scmp.lt.s32.totalorder %s24, 1
        %s513 = scalar_select %p512, %s24, 1
        %p514 = scmp.lt.s32.totalorder %s511, 7
        %s515 = scalar_select %p514, %s511, 7
        %s516 = smul.addr %s513, 8
        %s517 = sadd.s32 %s515, %s516
        %s518 = smul.addr %s517, 8
        %s519 = scalar_lea.vmem %s8, %s518
        %p520 = pneg %p233
        %p521 = pneg %p230
        %p522 = pneg %p261
        %p523 = pneg %p258
        %s524 = sand.u32 %s248, 1
        %s525 = sand.u32 %s248, 1
        %s526 = smul.addr %s525, 64
        %s527 = scalar_lea.vmem [#allocation4], %s526
        %p528 = scmp.lt.s32.totalorder %s24, 1
        %s529 = scalar_select %p528, %s24, 1
        %s530 = smul.addr %s529, 4
        %s531 = smul.addr %s530, 4
        %s532 = scalar_lea.vmem %s0, %s531
        %s533 = smul.u32 4, %s25
        %s534 = smul.u32 4, %s25
        %p535 = scmp.lt.s32.totalorder %s24, 1
        %s536 = scalar_select %p535, %s24, 1
        %p537 = scmp.lt.s32.totalorder %s534, 7
        %s538 = scalar_select %p537, %s534, 7
        %s539 = smul.addr %s536, 8
        %s540 = sadd.s32 %s538, %s539
        %s541 = smul.addr %s540, 8
        %s542 = scalar_lea.vmem %s8, %s541
        %s543 = smul.u32 4, %s25
        %s544 = smul.u32 4, %s25
        %p546 = scmp.eq.s32.totalorder %s25, 0
        // Predicated region
        $region80: #{decoder_block_forward.1} parent=74 // pred_check
          %p547 = pneg %p546
        $region81: #{decoder_block_forward.1} parent=74 // pred_check_branch
          %549 = sbr.rel (%p547) target = $region83
        $region82: #{decoder_block_forward.1} parent=74 // pred_region
          %v550 = vld [vmem:[%s532] sm:$0xff]
          %v551 = vld [vmem:[%s532 + $0x8] sm:$0xff]
          %v552 = vld [vmem:[%s1] sm:$0x3]
          %v553 = vld [vmem:[%s2] sm:$0xf]
          %555 = vset.pattern.permute.xlu0 0
          %556 = vperm.xlu0 %555, %v553
          %v557 = vpop.permute.xlu0 %556
          %v561 = vunpack.c.l.b16 %v550
          %v562 = vunpack.c.h.b16 %v550
          %v563 = vunpack.c.l.b16 %v551
          %v564 = vunpack.c.h.b16 %v551
          %v565 = vpack.c.b16 %v563, %v561
          %v566 = vpack.c.b16 %v564, %v562
          %vm569 = vcmask 130048
          %v571 = vsel %vm569, %v552, 0
          %573 = vmatpush.bf16.msra.mxu0 0
          %574 = vmatpush.bf16.msra.mxu0 0
          %575 = vmatpush.bf16.msra.mxu0 0
          %576 = vmatpush.bf16.msra.mxu0 0
          %577 = vmatpush.bf16.msra.mxu0 0
          %578 = vmatpush.bf16.msra.mxu0 0
          %579 = vmatpush.bf16.msra.mxu0 0
          %580 = vmatpush.bf16.msra.mxu0 %v565
          %581 = vmatmul.bf16.gmra.mxu0 %v571
          %v582 = vpop.f32.mrf.mxu0
          %v583 = vadd.f32 %v557, %v582
          %v584 = vpop.f32.mrf.mxu0
          %585 = vdwg.mxu0
          %586 = vmatpush.bf16.msra.mxu0 0
          %587 = vmatpush.bf16.msra.mxu0 0
          %588 = vmatpush.bf16.msra.mxu0 0
          %589 = vmatpush.bf16.msra.mxu0 0
          %590 = vmatpush.bf16.msra.mxu0 0
          %591 = vmatpush.bf16.msra.mxu0 0
          %592 = vmatpush.bf16.msra.mxu0 0
          %593 = vmatpush.bf16.msra.mxu0 %v566
          %594 = vmatmul.bf16.gmra.mxu0 %v571
          %v595 = vpop.f32.mrf.mxu0
          %v596 = vadd.f32 %v557, %v595
          %v597 = vpop.f32.mrf.mxu0
          %598 = vdwg.mxu0
          %v599 = vmax.f32 %v583, 0.0
          %v600 = vmax.f32 %v596, 0.0
          %v601 = vld [vmem:[%s3] sm:$0xf]
          %603 = vset.pattern.permute.xlu0 0
          %604 = vperm.xlu0 %603, %v601
          %v605 = vpop.permute.xlu0 %604
          %v607 = vmul.f32 %v599, %v605
          %v608 = vmul.f32 %v600, %v605
          %v609 = vld [vmem:[%s4] sm:$0xf]
          %611 = vset.pattern.permute.xlu0 0
          %612 = vperm.xlu0 %611, %v609
          %v613 = vpop.permute.xlu0 %612
          %v615 = vadd.f32 %v607, %v613
          %v616 = vadd.f32 %v608, %v613
          %v617 = vpack.c.bf16 %v616, %v615
          %v619 = vrot.slane %v617, 2
          %vm620 = vcmask 1041408
          %v623 = vsel %vm620, %v617, %v619
          %625 = vst [vmem:[#allocation2] sm:$0xf] %v623
        $region83: #{decoder_block_forward.1} parent=74 // pred_fallthru
          _
        %v626 = vld [vmem:[#allocation2] sm:$0xf]
        %v627 = vld [vmem:[%s482] sm:$0xff]
        %v628 = vld [vmem:[%s482 + $0x8] sm:$0xff]
        %v629 = vld [vmem:[%s482 + $0x10] sm:$0xff]
        %v630 = vld [vmem:[%s482 + $0x18] sm:$0xff]
        %v631 = vld [vmem:[%s482 + $0x20] sm:$0xff]
        %v632 = vld [vmem:[%s482 + $0x28] sm:$0xff]
        %v633 = vld [vmem:[%s482 + $0x30] sm:$0xff]
        %v634 = vld [vmem:[%s482 + $0x38] sm:$0xff]
        %v635 = vld [vmem:[%s482 + $0x40] sm:$0xff]
        %v636 = vld [vmem:[%s482 + $0x48] sm:$0xff]
        %v637 = vld [vmem:[%s482 + $0x50] sm:$0xff]
        %v638 = vld [vmem:[%s482 + $0x58] sm:$0xff]
        %v639 = vld [vmem:[%s482 + $0x60] sm:$0xff]
        %v640 = vld [vmem:[%s482 + $0x68] sm:$0xff]
        %v641 = vld [vmem:[%s482 + $0x70] sm:$0xff]
        %v642 = vld [vmem:[%s482 + $0x78] sm:$0xff]
        %v643 = vld [vmem:[%s482 + $0x80] sm:$0xff]
        %v644 = vld [vmem:[%s482 + $0x88] sm:$0xff]
        %v645 = vld [vmem:[%s482 + $0x90] sm:$0xff]
        %v646 = vld [vmem:[%s482 + $0x98] sm:$0xff]
        %v647 = vld [vmem:[%s482 + $0xa0] sm:$0xff]
        %v648 = vld [vmem:[%s482 + $0xa8] sm:$0xff]
        %v649 = vld [vmem:[%s482 + $0xb0] sm:$0xff]
        %v650 = vld [vmem:[%s482 + $0xb8] sm:$0xff]
        %v651 = vld [vmem:[%s482 + $0xc0] sm:$0xff]
        %v652 = vld [vmem:[%s482 + $0xc8] sm:$0xff]
        %v653 = vld [vmem:[%s482 + $0xd0] sm:$0xff]
        %v654 = vld [vmem:[%s482 + $0xd8] sm:$0xff]
        %v655 = vld [vmem:[%s482 + $0xe0] sm:$0xff]
        %v656 = vld [vmem:[%s482 + $0xe8] sm:$0xff]
        %v657 = vld [vmem:[%s482 + $0xf0] sm:$0xff]
        %v658 = vld [vmem:[%s482 + $0xf8] sm:$0xff]
        %v659 = vld [vmem:[%s482 + $0x100] sm:$0xff]
        %v660 = vld [vmem:[%s482 + $0x108] sm:$0xff]
        %v661 = vld [vmem:[%s482 + $0x110] sm:$0xff]
        %v662 = vld [vmem:[%s482 + $0x118] sm:$0xff]
        %v663 = vld [vmem:[%s482 + $0x120] sm:$0xff]
        %v664 = vld [vmem:[%s482 + $0x128] sm:$0xff]
        %v665 = vld [vmem:[%s482 + $0x130] sm:$0xff]
        %v666 = vld [vmem:[%s482 + $0x138] sm:$0xff]
        %v667 = vld [vmem:[%s482 + $0x140] sm:$0xff]
        %v668 = vld [vmem:[%s482 + $0x148] sm:$0xff]
        %v669 = vld [vmem:[%s482 + $0x150] sm:$0xff]
        %v670 = vld [vmem:[%s482 + $0x158] sm:$0xff]
        %v671 = vld [vmem:[%s482 + $0x160] sm:$0xff]
        %v672 = vld [vmem:[%s482 + $0x168] sm:$0xff]
        %v673 = vld [vmem:[%s482 + $0x170] sm:$0xff]
        %v674 = vld [vmem:[%s482 + $0x178] sm:$0xff]
        %v675 = vld [vmem:[%s482 + $0x180] sm:$0xff]
        %v676 = vld [vmem:[%s482 + $0x188] sm:$0xff]
        %v677 = vld [vmem:[%s482 + $0x190] sm:$0xff]
        %v678 = vld [vmem:[%s482 + $0x198] sm:$0xff]
        %v679 = vld [vmem:[%s482 + $0x1a0] sm:$0xff]
        %v680 = vld [vmem:[%s482 + $0x1a8] sm:$0xff]
        %v681 = vld [vmem:[%s482 + $0x1b0] sm:$0xff]
        %v682 = vld [vmem:[%s482 + $0x1b8] sm:$0xff]
        %v683 = vld [vmem:[%s482 + $0x1c0] sm:$0xff]
        %v684 = vld [vmem:[%s482 + $0x1c8] sm:$0xff]
        %v685 = vld [vmem:[%s482 + $0x1d0] sm:$0xff]
        %v686 = vld [vmem:[%s482 + $0x1d8] sm:$0xff]
        %v687 = vld [vmem:[%s482 + $0x1e0] sm:$0xff]
        %v688 = vld [vmem:[%s482 + $0x1e8] sm:$0xff]
        %v689 = vld [vmem:[%s482 + $0x1f0] sm:$0xff]
        %v690 = vld [vmem:[%s482 + $0x1f8] sm:$0xff]
        %692 = vst [vmem:[#allocation1] ss:$4 sm:$0xff] %v626
        %v693 = vld.sshfl [vmem:[#allocation1] sm:$0xff pattern:$0x73625140]
        %v694 = vld.sshfl [vmem:[#allocation1 + $0x8] sm:$0xff pattern:$0x73625140]
        %v761 = vunpack.c.l.b16 %v627
        %v762 = vunpack.c.h.b16 %v627
        %v763 = vunpack.c.l.b16 %v628
        %v764 = vunpack.c.h.b16 %v628
        %v765 = vunpack.c.l.b16 %v629
        %v766 = vunpack.c.h.b16 %v629
        %v767 = vunpack.c.l.b16 %v630
        %v768 = vunpack.c.h.b16 %v630
        %v769 = vunpack.c.l.b16 %v631
        %v770 = vunpack.c.h.b16 %v631
        %v771 = vunpack.c.l.b16 %v632
        %v772 = vunpack.c.h.b16 %v632
        %v773 = vunpack.c.l.b16 %v633
        %v774 = vunpack.c.h.b16 %v633
        %v775 = vunpack.c.l.b16 %v634
        %v776 = vunpack.c.h.b16 %v634
        %v777 = vunpack.c.l.b16 %v635
        %v778 = vunpack.c.h.b16 %v635
        %v779 = vunpack.c.l.b16 %v636
        %v780 = vunpack.c.h.b16 %v636
        %v781 = vunpack.c.l.b16 %v637
        %v782 = vunpack.c.h.b16 %v637
        %v783 = vunpack.c.l.b16 %v638
        %v784 = vunpack.c.h.b16 %v638
        %v785 = vunpack.c.l.b16 %v639
        %v786 = vunpack.c.h.b16 %v639
        %v787 = vunpack.c.l.b16 %v640
        %v788 = vunpack.c.h.b16 %v640
        %v789 = vunpack.c.l.b16 %v641
        %v790 = vunpack.c.h.b16 %v641
        %v791 = vunpack.c.l.b16 %v642
        %v792 = vunpack.c.h.b16 %v642
        %v793 = vunpack.c.l.b16 %v643
        %v794 = vunpack.c.h.b16 %v643
        %v795 = vunpack.c.l.b16 %v644
        %v796 = vunpack.c.h.b16 %v644
        %v797 = vunpack.c.l.b16 %v645
        %v798 = vunpack.c.h.b16 %v645
        %v799 = vunpack.c.l.b16 %v646
        %v800 = vunpack.c.h.b16 %v646
        %v801 = vunpack.c.l.b16 %v647
        %v802 = vunpack.c.h.b16 %v647
        %v803 = vunpack.c.l.b16 %v648
        %v804 = vunpack.c.h.b16 %v648
        %v805 = vunpack.c.l.b16 %v649
        %v806 = vunpack.c.h.b16 %v649
        %v807 = vunpack.c.l.b16 %v650
        %v808 = vunpack.c.h.b16 %v650
        %v809 = vunpack.c.l.b16 %v651
        %v810 = vunpack.c.h.b16 %v651
        %v811 = vunpack.c.l.b16 %v652
        %v812 = vunpack.c.h.b16 %v652
        %v813 = vunpack.c.l.b16 %v653
        %v814 = vunpack.c.h.b16 %v653
        %v815 = vunpack.c.l.b16 %v654
        %v816 = vunpack.c.h.b16 %v654
        %v817 = vunpack.c.l.b16 %v655
        %v818 = vunpack.c.h.b16 %v655
        %v819 = vunpack.c.l.b16 %v656
        %v820 = vunpack.c.h.b16 %v656
        %v821 = vunpack.c.l.b16 %v657
        %v822 = vunpack.c.h.b16 %v657
        %v823 = vunpack.c.l.b16 %v658
        %v824 = vunpack.c.h.b16 %v658
        %v825 = vunpack.c.l.b16 %v659
        %v826 = vunpack.c.h.b16 %v659
        %v827 = vunpack.c.l.b16 %v660
        %v828 = vunpack.c.h.b16 %v660
        %v829 = vunpack.c.l.b16 %v661
        %v830 = vunpack.c.h.b16 %v661
        %v831 = vunpack.c.l.b16 %v662
        %v832 = vunpack.c.h.b16 %v662
        %v833 = vunpack.c.l.b16 %v663
        %v834 = vunpack.c.h.b16 %v663
        %v835 = vunpack.c.l.b16 %v664
        %v836 = vunpack.c.h.b16 %v664
        %v837 = vunpack.c.l.b16 %v665
        %v838 = vunpack.c.h.b16 %v665
        %v839 = vunpack.c.l.b16 %v666
        %v840 = vunpack.c.h.b16 %v666
        %v841 = vunpack.c.l.b16 %v667
        %v842 = vunpack.c.h.b16 %v667
        %v843 = vunpack.c.l.b16 %v668
        %v844 = vunpack.c.h.b16 %v668
        %v845 = vunpack.c.l.b16 %v669
        %v846 = vunpack.c.h.b16 %v669
        %v847 = vunpack.c.l.b16 %v670
        %v848 = vunpack.c.h.b16 %v670
        %v849 = vunpack.c.l.b16 %v671
        %v850 = vunpack.c.h.b16 %v671
        %v851 = vunpack.c.l.b16 %v672
        %v852 = vunpack.c.h.b16 %v672
        %v853 = vunpack.c.l.b16 %v673
        %v854 = vunpack.c.h.b16 %v673
        %v855 = vunpack.c.l.b16 %v674
        %v856 = vunpack.c.h.b16 %v674
        %v857 = vunpack.c.l.b16 %v675
        %v858 = vunpack.c.h.b16 %v675
        %v859 = vunpack.c.l.b16 %v676
        %v860 = vunpack.c.h.b16 %v676
        %v861 = vunpack.c.l.b16 %v677
        %v862 = vunpack.c.h.b16 %v677
        %v863 = vunpack.c.l.b16 %v678
        %v864 = vunpack.c.h.b16 %v678
        %v865 = vunpack.c.l.b16 %v679
        %v866 = vunpack.c.h.b16 %v679
        %v867 = vunpack.c.l.b16 %v680
        %v868 = vunpack.c.h.b16 %v680
        %v869 = vunpack.c.l.b16 %v681
        %v870 = vunpack.c.h.b16 %v681
        %v871 = vunpack.c.l.b16 %v682
        %v872 = vunpack.c.h.b16 %v682
        %v873 = vunpack.c.l.b16 %v683
        %v874 = vunpack.c.h.b16 %v683
        %v875 = vunpack.c.l.b16 %v684
        %v876 = vunpack.c.h.b16 %v684
        %v877 = vunpack.c.l.b16 %v685
        %v878 = vunpack.c.h.b16 %v685
        %v879 = vunpack.c.l.b16 %v686
        %v880 = vunpack.c.h.b16 %v686
        %v881 = vunpack.c.l.b16 %v687
        %v882 = vunpack.c.h.b16 %v687
        %v883 = vunpack.c.l.b16 %v688
        %v884 = vunpack.c.h.b16 %v688
        %v885 = vunpack.c.l.b16 %v689
        %v886 = vunpack.c.h.b16 %v689
        %v887 = vunpack.c.l.b16 %v690
        %v888 = vunpack.c.h.b16 %v690
        %v889 = vpack.c.b16 %v765, %v761
        %v890 = vpack.c.b16 %v766, %v762
        %v891 = vpack.c.b16 %v767, %v763
        %v892 = vpack.c.b16 %v768, %v764
        %v893 = vpack.c.b16 %v773, %v769
        %v894 = vpack.c.b16 %v774, %v770
        %v895 = vpack.c.b16 %v775, %v771
        %v896 = vpack.c.b16 %v776, %v772
        %v897 = vpack.c.b16 %v781, %v777
        %v898 = vpack.c.b16 %v782, %v778
        %v899 = vpack.c.b16 %v783, %v779
        %v900 = vpack.c.b16 %v784, %v780
        %v901 = vpack.c.b16 %v789, %v785
        %v902 = vpack.c.b16 %v790, %v786
        %v903 = vpack.c.b16 %v791, %v787
        %v904 = vpack.c.b16 %v792, %v788
        %v905 = vpack.c.b16 %v797, %v793
        %v906 = vpack.c.b16 %v798, %v794
        %v907 = vpack.c.b16 %v799, %v795
        %v908 = vpack.c.b16 %v800, %v796
        %v909 = vpack.c.b16 %v805, %v801
        %v910 = vpack.c.b16 %v806, %v802
        %v911 = vpack.c.b16 %v807, %v803
        %v912 = vpack.c.b16 %v808, %v804
        %v913 = vpack.c.b16 %v813, %v809
        %v914 = vpack.c.b16 %v814, %v810
        %v915 = vpack.c.b16 %v815, %v811
        %v916 = vpack.c.b16 %v816, %v812
        %v917 = vpack.c.b16 %v821, %v817
        %v918 = vpack.c.b16 %v822, %v818
        %v919 = vpack.c.b16 %v823, %v819
        %v920 = vpack.c.b16 %v824, %v820
        %v921 = vpack.c.b16 %v829, %v825
        %v922 = vpack.c.b16 %v830, %v826
        %v923 = vpack.c.b16 %v831, %v827
        %v924 = vpack.c.b16 %v832, %v828
        %v925 = vpack.c.b16 %v837, %v833
        %v926 = vpack.c.b16 %v838, %v834
        %v927 = vpack.c.b16 %v839, %v835
        %v928 = vpack.c.b16 %v840, %v836
        %v929 = vpack.c.b16 %v845, %v841
        %v930 = vpack.c.b16 %v846, %v842
        %v931 = vpack.c.b16 %v847, %v843
        %v932 = vpack.c.b16 %v848, %v844
        %v933 = vpack.c.b16 %v853, %v849
        %v934 = vpack.c.b16 %v854, %v850
        %v935 = vpack.c.b16 %v855, %v851
        %v936 = vpack.c.b16 %v856, %v852
        %v937 = vpack.c.b16 %v861, %v857
        %v938 = vpack.c.b16 %v862, %v858
        %v939 = vpack.c.b16 %v863, %v859
        %v940 = vpack.c.b16 %v864, %v860
        %v941 = vpack.c.b16 %v869, %v865
        %v942 = vpack.c.b16 %v870, %v866
        %v943 = vpack.c.b16 %v871, %v867
        %v944 = vpack.c.b16 %v872, %v868
        %v945 = vpack.c.b16 %v877, %v873
        %v946 = vpack.c.b16 %v878, %v874
        %v947 = vpack.c.b16 %v879, %v875
        %v948 = vpack.c.b16 %v880, %v876
        %v949 = vpack.c.b16 %v885, %v881
        %v950 = vpack.c.b16 %v886, %v882
        %v951 = vpack.c.b16 %v887, %v883
        %v952 = vpack.c.b16 %v888, %v884
        %1017 = vmatpush.bf16.msra.mxu0 %v917
        %1018 = vmatpush.bf16.msra.mxu0 %v913
        %1019 = vmatpush.bf16.msra.mxu0 %v909
        %1020 = vmatpush.bf16.msra.mxu0 %v905
        %1021 = vmatpush.bf16.msra.mxu0 %v901
        %1022 = vmatpush.bf16.msra.mxu0 %v897
        %1023 = vmatpush.bf16.msra.mxu0 %v893
        %1024 = vmatpush.bf16.msra.mxu0 %v889
        %1025 = vmatmul.bf16.gmra.mxu0 %v693
        %v1026 = vpop.f32.mrf.mxu0
        %v1027 = vadd.f32 0.0, %v1026
        %v1028 = vpop.f32.mrf.mxu0
        %1029 = vdwg.mxu0
        %1030 = vmatpush.bf16.msra.mxu0 %v949
        %1031 = vmatpush.bf16.msra.mxu0 %v945
        %1032 = vmatpush.bf16.msra.mxu0 %v941
        %1033 = vmatpush.bf16.msra.mxu0 %v937
        %1034 = vmatpush.bf16.msra.mxu0 %v933
        %1035 = vmatpush.bf16.msra.mxu0 %v929
        %1036 = vmatpush.bf16.msra.mxu0 %v925
        %1037 = vmatpush.bf16.msra.mxu0 %v921
        %1038 = vmatmul.bf16.gmra.mxu0 %v694
        %v1039 = vpop.f32.mrf.mxu0
        %v1040 = vadd.f32 %v1027, %v1039
        %v1041 = vpop.f32.mrf.mxu0
        %1042 = vdwg.mxu0
        %1043 = vmatpush.bf16.msra.mxu0 %v918
        %1044 = vmatpush.bf16.msra.mxu0 %v914
        %1045 = vmatpush.bf16.msra.mxu0 %v910
        %1046 = vmatpush.bf16.msra.mxu0 %v906
        %1047 = vmatpush.bf16.msra.mxu0 %v902
        %1048 = vmatpush.bf16.msra.mxu0 %v898
        %1049 = vmatpush.bf16.msra.mxu0 %v894
        %1050 = vmatpush.bf16.msra.mxu0 %v890
        %1051 = vmatmul.bf16.gmra.mxu0 %v693
        %v1052 = vpop.f32.mrf.mxu0
        %v1053 = vadd.f32 0.0, %v1052
        %v1054 = vpop.f32.mrf.mxu0
        %1055 = vdwg.mxu0
        %1056 = vmatpush.bf16.msra.mxu0 %v950
        %1057 = vmatpush.bf16.msra.mxu0 %v946
        %1058 = vmatpush.bf16.msra.mxu0 %v942
        %1059 = vmatpush.bf16.msra.mxu0 %v938
        %1060 = vmatpush.bf16.msra.mxu0 %v934
        %1061 = vmatpush.bf16.msra.mxu0 %v930
        %1062 = vmatpush.bf16.msra.mxu0 %v926
        %1063 = vmatpush.bf16.msra.mxu0 %v922
        %1064 = vmatmul.bf16.gmra.mxu0 %v694
        %v1065 = vpop.f32.mrf.mxu0
        %v1066 = vadd.f32 %v1053, %v1065
        %v1067 = vpop.f32.mrf.mxu0
        %1068 = vdwg.mxu0
        %1069 = vmatpush.bf16.msra.mxu0 %v919
        %1070 = vmatpush.bf16.msra.mxu0 %v915
        %1071 = vmatpush.bf16.msra.mxu0 %v911
        %1072 = vmatpush.bf16.msra.mxu0 %v907
        %1073 = vmatpush.bf16.msra.mxu0 %v903
        %1074 = vmatpush.bf16.msra.mxu0 %v899
        %1075 = vmatpush.bf16.msra.mxu0 %v895
        %1076 = vmatpush.bf16.msra.mxu0 %v891
        %1077 = vmatmul.bf16.gmra.mxu0 %v693
        %v1078 = vpop.f32.mrf.mxu0
        %v1079 = vadd.f32 0.0, %v1078
        %v1080 = vpop.f32.mrf.mxu0
        %1081 = vdwg.mxu0
        %1082 = vmatpush.bf16.msra.mxu0 %v951
        %1083 = vmatpush.bf16.msra.mxu0 %v947
        %1084 = vmatpush.bf16.msra.mxu0 %v943
        %1085 = vmatpush.bf16.msra.mxu0 %v939
        %1086 = vmatpush.bf16.msra.mxu0 %v935
        %1087 = vmatpush.bf16.msra.mxu0 %v931
        %1088 = vmatpush.bf16.msra.mxu0 %v927
        %1089 = vmatpush.bf16.msra.mxu0 %v923
        %1090 = vmatmul.bf16.gmra.mxu0 %v694
        %v1091 = vpop.f32.mrf.mxu0
        %v1092 = vadd.f32 %v1079, %v1091
        %v1093 = vpop.f32.mrf.mxu0
        %1094 = vdwg.mxu0
        %1095 = vmatpush.bf16.msra.mxu0 %v920
        %1096 = vmatpush.bf16.msra.mxu0 %v916
        %1097 = vmatpush.bf16.msra.mxu0 %v912
        %1098 = vmatpush.bf16.msra.mxu0 %v908
        %1099 = vmatpush.bf16.msra.mxu0 %v904
        %1100 = vmatpush.bf16.msra.mxu0 %v900
        %1101 = vmatpush.bf16.msra.mxu0 %v896
        %1102 = vmatpush.bf16.msra.mxu0 %v892
        %1103 = vmatmul.bf16.gmra.mxu0 %v693
        %v1104 = vpop.f32.mrf.mxu0
        %v1105 = vadd.f32 0.0, %v1104
        %v1106 = vpop.f32.mrf.mxu0
        %1107 = vdwg.mxu0
        %1108 = vmatpush.bf16.msra.mxu0 %v952
        %1109 = vmatpush.bf16.msra.mxu0 %v948
        %1110 = vmatpush.bf16.msra.mxu0 %v944
        %1111 = vmatpush.bf16.msra.mxu0 %v940
        %1112 = vmatpush.bf16.msra.mxu0 %v936
        %1113 = vmatpush.bf16.msra.mxu0 %v932
        %1114 = vmatpush.bf16.msra.mxu0 %v928
        %1115 = vmatpush.bf16.msra.mxu0 %v924
        %1116 = vmatmul.bf16.gmra.mxu0 %v694
        %v1117 = vpop.f32.mrf.mxu0
        %v1118 = vadd.f32 %v1105, %v1117
        %v1119 = vpop.f32.mrf.mxu0
        %1120 = vdwg.mxu0
        %v1121 = vmax.f32 %v1040, 0.0
        %v1122 = vmax.f32 %v1066, 0.0
        %v1123 = vmax.f32 %v1092, 0.0
        %v1124 = vmax.f32 %v1118, 0.0
        %v1125 = vld [vmem:[%s6] sm:$0xf]
        %v1126 = vpack.c.bf16 %v1121, %v1121
        %v1127 = vpack.c.bf16 %v1122, %v1122
        %v1128 = vpack.c.bf16 %v1123, %v1123
        %v1129 = vpack.c.bf16 %v1124, %v1124
        %v1130 = vld [vmem:[%s7] sm:$0xff]
        %1132 = vset.pattern.permute.xlu0 0
        %1133 = vperm.xlu0 %1132, %v1130
        %v1134 = vpop.permute.xlu0 %1133
        %vm1136 = vcmask 31744
        %v1138 = vsel %vm1136, %v1125, 0
        %vm1140 = vcmask 1041408
        %v1142 = vsel %vm1140, %v1126, 0
        %v1145 = vsel %vm1140, %v1127, 0
        %v1148 = vsel %vm1140, %v1128, 0
        %v1151 = vsel %vm1140, %v1129, 0
        %1153 = vmatpush.bf16.msra.mxu0 0
        %1154 = vmatpush.bf16.msra.mxu0 0
        %1155 = vmatpush.bf16.msra.mxu0 0
        %1156 = vmatpush.bf16.msra.mxu0 0
        %1157 = vmatpush.bf16.msra.mxu0 0
        %1158 = vmatpush.bf16.msra.mxu0 0
        %1159 = vmatpush.bf16.msra.mxu0 0
        %1160 = vmatpush.bf16.msra.mxu0 %v1142
        %1161 = vmatmul.bf16.gmra.mxu0 %v1138
        %v1162 = vpop.f32.mrf.mxu0
        %v1163 = vadd.f32 %v1134, %v1162
        %v1164 = vpop.f32.mrf.mxu0
        %1165 = vdwg.mxu0
        %1166 = vmatpush.bf16.msra.mxu0 0
        %1167 = vmatpush.bf16.msra.mxu0 0
        %1168 = vmatpush.bf16.msra.mxu0 0
        %1169 = vmatpush.bf16.msra.mxu0 0
        %1170 = vmatpush.bf16.msra.mxu0 0
        %1171 = vmatpush.bf16.msra.mxu0 0
        %1172 = vmatpush.bf16.msra.mxu0 0
        %1173 = vmatpush.bf16.msra.mxu0 %v1145
        %1174 = vmatmul.bf16.gmra.mxu0 %v1138
        %v1175 = vpop.f32.mrf.mxu0
        %v1176 = vadd.f32 %v1134, %v1175
        %v1177 = vpop.f32.mrf.mxu0
        %1178 = vdwg.mxu0
        %1179 = vmatpush.bf16.msra.mxu0 0
        %1180 = vmatpush.bf16.msra.mxu0 0
        %1181 = vmatpush.bf16.msra.mxu0 0
        %1182 = vmatpush.bf16.msra.mxu0 0
        %1183 = vmatpush.bf16.msra.mxu0 0
        %1184 = vmatpush.bf16.msra.mxu0 0
        %1185 = vmatpush.bf16.msra.mxu0 0
        %1186 = vmatpush.bf16.msra.mxu0 %v1148
        %1187 = vmatmul.bf16.gmra.mxu0 %v1138
        %v1188 = vpop.f32.mrf.mxu0
        %v1189 = vadd.f32 %v1134, %v1188
        %v1190 = vpop.f32.mrf.mxu0
        %1191 = vdwg.mxu0
        %1192 = vmatpush.bf16.msra.mxu0 0
        %1193 = vmatpush.bf16.msra.mxu0 0
        %1194 = vmatpush.bf16.msra.mxu0 0
        %1195 = vmatpush.bf16.msra.mxu0 0
        %1196 = vmatpush.bf16.msra.mxu0 0
        %1197 = vmatpush.bf16.msra.mxu0 0
        %1198 = vmatpush.bf16.msra.mxu0 0
        %1199 = vmatpush.bf16.msra.mxu0 %v1151
        %1200 = vmatmul.bf16.gmra.mxu0 %v1138
        %v1201 = vpop.f32.mrf.mxu0
        %v1202 = vadd.f32 %v1134, %v1201
        %v1203 = vpop.f32.mrf.mxu0
        %1204 = vdwg.mxu0
        %v1205 = vmax.f32 %v1163, 0.0
        %v1206 = vmax.f32 %v1176, 0.0
        %v1207 = vmax.f32 %v1189, 0.0
        %v1208 = vmax.f32 %v1202, 0.0
        %1209 = vst [vmem:[%s527] sm:$0xff] %v1205
        %1210 = vst [vmem:[%s527 + $0x8] sm:$0xff] %v1206
        %1211 = vst [vmem:[%s527 + $0x10] sm:$0xff] %v1207
        %1212 = vst [vmem:[%s527 + $0x18] sm:$0xff] %v1208
        %v1213 = vld [vmem:[%s542] sm:$0xff]
        %v1214 = vld [vmem:[%s542 + $0x8] sm:$0xff]
        %v1215 = vld [vmem:[%s542 + $0x10] sm:$0xff]
        %v1216 = vld [vmem:[%s542 + $0x18] sm:$0xff]
        %1217 = vst [vmem:[%s527 + $0x20] sm:$0xff] %v1213
        %1218 = vst [vmem:[%s527 + $0x28] sm:$0xff] %v1214
        %1219 = vst [vmem:[%s527 + $0x30] sm:$0xff] %v1215
        %1220 = vst [vmem:[%s527 + $0x38] sm:$0xff] %v1216
        %s1221 = sand.u32 %s248, 1
        %s1222 = sand.u32 %s248, 1
        %s1223 = smul.addr %s1222, 64
        %s1224 = scalar_lea.vmem [#allocation4], %s1223
        // Predicated region
        $region84: #{decoder_block_forward.1} parent=74 // pred_check
          %p1225 = pneg %p258
        $region85: #{decoder_block_forward.1} parent=74 // pred_check_branch
          %1227 = sbr.rel (%p1225) target = $region87
        $region86: #{decoder_block_forward.1} parent=74 // pred_region
          %s1228 = smul.u32 4, %s25
          %s1229 = smul.addr %s24, 16
          %s1230 = sadd.s32 %s1228, %s1229
          %s1231 = smul.addr %s1230, 8
          %s1232 = scalar_lea.vmem %s9, %s1231
          // Predicated region
          $region88: #{decoder_block_forward.1} parent=86 // pred_check
            _
          $region89: #{decoder_block_forward.1} parent=86 // pred_check_branch
            %1234 = sbr.rel (0) target = $region91
          $region90: #{decoder_block_forward.1} parent=86 // pred_region
            // Predicated region
            $region92: #{decoder_block_forward.1} parent=90 // pred_check
              _
            $region93: #{decoder_block_forward.1} parent=90 // pred_check_branch
              %1236 = sbr.rel (0) target = $region95
            $region94: #{decoder_block_forward.1} parent=90 // pred_region
              loop: start=0, step=1, limit=1
              $region96: #{decoder_block_forward.1} parent=94 // loop_pre_header
                _
              $region97: #{decoder_block_forward.1} parent=94 // loop_header
                %s1238 = sphi 0, %s1242
                %p1239 = scmp.ge.s32.totalorder %s1238, 1
                %s1243 = sphi %s1224, %s1224
                %s1244 = sphi %s1232, %s1232
              $region98: #{decoder_block_forward.1} parent=94 // loop_header_branch
                %1241 = sbr.rel (%p1239) target = $region102
              $region99: #{decoder_block_forward.1} parent=94 // loop_body
                %v1245 = vld [vmem:[%s1243] sm:$0xff]
                %1246 = vst [vmem:[%s1244] sm:$0xff] %v1245
                %v1247 = vld [vmem:[%s1243 + $0x8] sm:$0xff]
                %1248 = vst [vmem:[%s1244 + $0x8] sm:$0xff] %v1247
                %v1249 = vld [vmem:[%s1243 + $0x10] sm:$0xff]
                %1250 = vst [vmem:[%s1244 + $0x10] sm:$0xff] %v1249
                %v1251 = vld [vmem:[%s1243 + $0x18] sm:$0xff]
                %1252 = vst [vmem:[%s1244 + $0x18] sm:$0xff] %v1251
                %v1253 = vld [vmem:[%s1243 + $0x20] sm:$0xff]
                %1254 = vst [vmem:[%s1244 + $0x40] sm:$0xff] %v1253
                %v1255 = vld [vmem:[%s1243 + $0x28] sm:$0xff]
                %1256 = vst [vmem:[%s1244 + $0x48] sm:$0xff] %v1255
                %v1257 = vld [vmem:[%s1243 + $0x30] sm:$0xff]
                %1258 = vst [vmem:[%s1244 + $0x50] sm:$0xff] %v1257
                %v1259 = vld [vmem:[%s1243 + $0x38] sm:$0xff]
                %1260 = vst [vmem:[%s1244 + $0x58] sm:$0xff] %v1259
              $region100: #{decoder_block_forward.1} parent=94 // loop_footer
                %s1242 = sadd.s32 1, %s1238
              $region101: #{decoder_block_forward.1} parent=94 // loop_footer_branch
                %1237 = sbr.rel target = $region97
              $region102: #{decoder_block_forward.1} parent=94 // loop_exit
                _
            $region95: #{decoder_block_forward.1} parent=90 // pred_fallthru
              _
            // Predicated region
            $region103: #{decoder_block_forward.1} parent=90 // pred_check
              _
            $region104: #{decoder_block_forward.1} parent=90 // pred_check_branch
              %1262 = sbr.rel target = $region106
            $region105: #{decoder_block_forward.1} parent=90 // pred_region
              _
            $region106: #{decoder_block_forward.1} parent=90 // pred_fallthru
              _
          $region91: #{decoder_block_forward.1} parent=86 // pred_fallthru
            _
          %1263 = vnop
        $region87: #{decoder_block_forward.1} parent=74 // pred_fallthru
          _
      $region75: #{decoder_block_forward.1} parent=5 // pred_fallthru
        _
      %p1264 = scmp.le.s32.totalorder 2, %s15
      // Predicated region
      $region107: #{decoder_block_forward.1} parent=5 // pred_check
        %p1265 = pneg %p1264
      $region108: #{decoder_block_forward.1} parent=5 // pred_check_branch
        %1267 = sbr.rel (%p1265) target = $region110
      $region109: #{decoder_block_forward.1} parent=5 // pred_region
        %s1268 = ssub.s32 %s15, 2
        // Predicated region
        $region111: #{decoder_block_forward.1} parent=109 // pred_check
          %p1269 = pneg %p264
        $region112: #{decoder_block_forward.1} parent=109 // pred_check_branch
          %1271 = sbr.rel (%p1269) target = $region114
        $region113: #{decoder_block_forward.1} parent=109 // pred_region
          %s1272 = sand.u32 %s249, 1
          %s1273 = sand.u32 %s249, 1
          %s1274 = smul.addr %s1273, 64
          %s1275 = scalar_lea.vmem [#allocation4], %s1274
        $region114: #{decoder_block_forward.1} parent=109 // pred_fallthru
          _
      $region110: #{decoder_block_forward.1} parent=5 // pred_fallthru
        _
    $region6: #{decoder_block_forward.1} parent=1 // loop_footer
      %s19 = sadd.s32 1, %s15
    $region7: #{decoder_block_forward.1} parent=1 // loop_footer_branch
      %14 = sbr.rel target = $region3
    $region8: #{decoder_block_forward.1} parent=1 // loop_exit
      _

</llo_original>
